<compile_context>
chip_gen: v6e
topology: v6e:2x2x1
jax: 0.10.0
libtpu: 0.0.40
codegen_flags: <defaults>
</compile_context>

<pallas_src>
import functools

import jax
import jax.numpy as jnp
from jax.experimental import pallas as pl
from jax.experimental.pallas import tpu as pltpu


def _round_up(n, m):
    return (n + m - 1) // m * m


def _device_kind():
    try:
        return jax.devices()[0].device_kind.lower()
    except Exception:
        return ""


def _vmem_capacity_bytes(is_v7):
    try:
        return int(pltpu.get_tpu_info().vmem_capacity_bytes)
    except Exception:
        return (64 << 20) if is_v7 else (128 << 20)


def _spec(shape, index_map, *, n_buf=2):
    """BlockSpec; constant-index operands can request single buffering."""
    if n_buf != 2 and hasattr(pl, "Buffered"):
        try:
            return pl.BlockSpec(shape, index_map,
                                pipeline_mode=pl.Buffered(n_buf))
        except Exception:
            pass   # older jax: fall back to default double buffering
    return pl.BlockSpec(shape, index_map)


# ---------------------------------------------------------------------------
# LSTM recurrence kernel: one (batch block, time block) grid step.
#   x_ref   : (Tc, Bb, Ep) bf16  time-major embedded block (streamed)
#   wih_ref : (Ep, 4*Hp)   bf16  transposed, per-gate padded W_ih
#   whh_ref : (Hp, 4*Hp)   bf16  transposed, per-gate padded W_hh
#   b_ref   : (1, 4*Hp)    f32   b_ih + b_hh (per-gate padded)
#   hl_ref  : (Bb, Hp)     f32   last-step hidden state (written on last t)
#   h_ref/c_ref : (Bb, Hp) f32   recurrent state, persists across grid steps
# ---------------------------------------------------------------------------
def lstm_kernel(x_ref, wih_ref, whh_ref, b_ref, hl_ref, h_ref, c_ref,
                *, gate_dtype):
    t_blk = pl.program_id(1)
    Tc = x_ref.shape[0]
    Hp = whh_ref.shape[0]
    mm_dtype = whh_ref.dtype

    @pl.when(t_blk == 0)
    def _init():
        h_ref[...] = jnp.zeros_like(h_ref)
        c_ref[...] = jnp.zeros_like(c_ref)

    def sig(z):
        return jax.nn.sigmoid(z.astype(gate_dtype)).astype(jnp.float32)

    def tnh(z):
        return jnp.tanh(z.astype(gate_dtype)).astype(jnp.float32)

    bias = b_ref[...]               # (1, 4*Hp) f32, loaded once per block
    h = h_ref[...]
    c = c_ref[...]

    # Fully unrolled recurrence.  Each step's x @ W_ih depends only on
    # x_ref[i] (not on h), so the scheduler can overlap step i+1's input
    # projection with step i's gate math -- no up-front whole-block
    # projection barrier on the serial critical path.
    # TODO(synk): hold W_hh in MXU weight staging across the unrolled block
    # (pltpu.matmul_push_rhs / matmul_acc_lhs / matmul_pop) to drop Tc-1
    # redundant RHS pushes from the latency-bound recurrence.
    for i in range(Tc):
        gates = (jnp.dot(x_ref[i], wih_ref[...],
                         preferred_element_type=jnp.float32)
                 + bias
                 + jnp.dot(h.astype(mm_dtype), whh_ref[...],
                           preferred_element_type=jnp.float32))
        # 128-lane aligned gate slices; consume gates as produced to keep the
        # vreg live-set small (avoid spill vld/vst on the recurrence path).
        i_g = sig(gates[:, 0 * Hp:1 * Hp])
        g_g = tnh(gates[:, 2 * Hp:3 * Hp])
        ig = i_g * g_g
        f_g = sig(gates[:, 1 * Hp:2 * Hp])
        c = f_g * c + ig
        o_g = sig(gates[:, 3 * Hp:4 * Hp])
        h = o_g * jnp.tanh(c)

    h_ref[...] = h
    c_ref[...] = c

    @pl.when(t_blk == pl.num_programs(1) - 1)
    def _store_last():
        hl_ref[...] = h


# ---------------------------------------------------------------------------
# FC head kernel (separate pallas_call, tiled over the vocab axis).
#   h_ref : (Bp, Hp) f32   last hidden state (constant across grid)
#   w_ref : (Hp, tv) bf16  FC weight tile
#   b_ref : (1, tv)  f32   FC bias tile
#   o_ref : (Bp, tv) f32   logits tile
# ---------------------------------------------------------------------------
def fc_kernel(h_ref, w_ref, b_ref, o_ref):
    o_ref[...] = (jnp.dot(h_ref[...].astype(w_ref.dtype), w_ref[...],
                          preferred_element_type=jnp.float32)
                  + b_ref[...])


# ---------------------------------------------------------------------------
# Wrapper: embedding gather + padding/layout prep + two gridded pallas_calls.
# ---------------------------------------------------------------------------
@functools.partial(jax.jit, static_argnames=("time_block", "matmul_dtype",
                                             "gates_bf16", "num_batch_blocks"))
def lstm_language_model(tokens, params, *, time_block=None,
                        matmul_dtype=jnp.bfloat16, gates_bf16=False,
                        num_batch_blocks=None):
    """tokens: (B, T) int32 token ids.  Returns logits (B, V) float32."""
    emb_table = params["embedding"]               # (V, E)
    w_ih = params["w_ih"]                         # (4H, E)  PyTorch layout
    w_hh = params["w_hh"]                         # (4H, H)
    b_ih = params["b_ih"]                         # (4H,)
    b_hh = params["b_hh"]                         # (4H,)
    w_fc = params["w_fc"]                         # (V, H)
    b_fc = params["b_fc"]                         # (V,)

    B, T = tokens.shape
    V, E = emb_table.shape
    H = w_hh.shape[1]

    kind = _device_kind()
    is_v7 = "v7" in kind or "tpu7" in kind

    LANE = 128
    Ep = _round_up(E, LANE)
    Hp = _round_up(H, LANE)
    Vp = _round_up(V, LANE)
    Bp = _round_up(B, 8)

    # ---- batch blocking: >=2 blocks on v7x so both TensorCores get work ---
    if num_batch_blocks is not None:
        nb = max(1, int(num_batch_blocks))
    else:
        nb = 2 if (is_v7 and Bp >= 16) else 1
    Bb = max(8, _round_up(pl.cdiv(Bp, nb), 8))
    max_bb = 128 if is_v7 else 256
    Bb = min(Bb, max_bb)
    Bp = _round_up(Bp, Bb)

    # ---- time blocking: bigger blocks on v5e/v6e, smaller on v7x ----------
    if time_block is None:
        target_tc = 4 if is_v7 else 8
        Tc = 1
        for d in range(min(T, target_tc), 0, -1):
            if T % d == 0:
                Tc = d
                break
    else:
        Tc = time_block
        assert T % Tc == 0, "time_block must divide the sequence length"

    # ---- weight layout prep (zero padding keeps the math exact) ----------
    def pad_gate_w(w, in_dim, in_pad):
        # (4H, in_dim) -> (in_pad, 4*Hp) in x @ W form; each gate block is
        # padded to Hp lanes separately so kernel slices stay 128-aligned.
        w4 = w.T.reshape(in_dim, 4, H)
        w4 = jnp.pad(w4, ((0, in_pad - in_dim), (0, 0), (0, Hp - H)))
        return w4.reshape(in_pad, 4 * Hp).astype(matmul_dtype)

    wih_p = pad_gate_w(w_ih, E, Ep)                                   # (Ep,4Hp)
    whh_p = pad_gate_w(w_hh, H, Hp)                                   # (Hp,4Hp)
    bias = (b_ih + b_hh).reshape(4, H)
    bias = jnp.pad(bias, ((0, 0), (0, Hp - H))).reshape(1, 4 * Hp)
    bias = bias.astype(jnp.float32)                                   # (1,4Hp)

    wfc_p = jnp.pad(w_fc.T, ((0, Hp - H), (0, Vp - V))).astype(matmul_dtype)
    bfc_p = jnp.pad(b_fc, (0, Vp - V)).reshape(1, Vp).astype(jnp.float32)

    # ---- time-major embedding gather, streamed to the kernel in bf16 ------
    # TODO(synk): for very large E, fuse the gather in-kernel instead
    # (scalar-prefetched token ids + embedding table in pl.ANY + manual
    # async-copy row gather) to avoid the HBM round trip of (T, B, E).
    emb_p = jnp.pad(emb_table, ((0, 0), (0, Ep - E))).astype(matmul_dtype)
    x_tm = jnp.take(emb_p, tokens.T, axis=0)                          # (T,B,Ep)
    if Bp != B:
        x_tm = jnp.pad(x_tm, ((0, 0), (0, Bp - B), (0, 0)))

    # ---- generation-aware VMEM budget -------------------------------------
    wb = jnp.dtype(matmul_dtype).itemsize
    vmem_phys = _vmem_capacity_bytes(is_v7)
    cap = max(16 << 20, min(vmem_phys - (16 << 20), 100 << 20))
    # Conservatively count 2 buffers for every auto-pipelined operand (the
    # constant weights request Buffered(1), so this over- rather than
    # under-estimates).
    lstm_est = (2 * Tc * Bb * Ep * wb                 # x (bf16, double buffer)
                + 2 * Ep * 4 * Hp * wb                # W_ih
                + 2 * Hp * 4 * Hp * wb                # W_hh
                + 2 * 4 * Hp * 4                      # bias
                + 2 * Bb * Hp * 4                     # h_last output
                + 2 * Bb * Hp * 4)                    # h, c scratch
    lstm_vmem_limit = int(min(cap, max(2 * lstm_est, 16 << 20)))

    gate_dtype = jnp.bfloat16 if gates_bf16 else jnp.float32

    # ---- (1) LSTM recurrence over the time grid ---------------------------
    grid = (Bp // Bb, T // Tc)
    h_last = pl.pallas_call(
        functools.partial(lstm_kernel, gate_dtype=gate_dtype),
        out_shape=jax.ShapeDtypeStruct((Bp, Hp), jnp.float32),
        grid_spec=pltpu.PrefetchScalarGridSpec(
            num_scalar_prefetch=0,
            grid=grid,
            in_specs=[
                pl.BlockSpec((Tc, Bb, Ep), lambda b, t: (t, b, 0)),
                _spec((Ep, 4 * Hp), lambda b, t: (0, 0), n_buf=1),
                _spec((Hp, 4 * Hp), lambda b, t: (0, 0), n_buf=1),
                _spec((1, 4 * Hp), lambda b, t: (0, 0), n_buf=1),
            ],
            out_specs=pl.BlockSpec((Bb, Hp), lambda b, t: (b, 0)),
            scratch_shapes=[
                pltpu.VMEM((Bb, Hp), jnp.float32),           # h
                pltpu.VMEM((Bb, Hp), jnp.float32),           # c
            ]),
        compiler_params=pltpu.CompilerParams(
            dimension_semantics=("parallel", "arbitrary"),
            vmem_limit_bytes=lstm_vmem_limit),
    )(x_tm, wih_p, whh_p, bias)

    # ---- (2) FC head: separate pallas_call, tiled over the vocab axis -----
    fc_budget = min(cap, 32 << 20)
    tv = 128
    for k in range(Vp // 128, 0, -1):
        cand = 128 * k
        if Vp % cand:
            continue
        need = (2 * Hp * cand * wb        # weight tile (double buffered)
                + 2 * Bp * cand * 4       # output tile
                + 2 * cand * 4            # bias tile
                + 2 * Bp * Hp * 4)        # resident h
        if need <= fc_budget:
            tv = cand
            break
    fc_est = (2 * Hp * tv * wb + 2 * Bp * tv * 4 + 2 * tv * 4
              + 2 * Bp * Hp * 4)
    fc_vmem_limit = int(min(cap, max(2 * fc_est, 16 << 20)))

    logits_p = pl.pallas_call(
        fc_kernel,
        out_shape=jax.ShapeDtypeStruct((Bp, Vp), jnp.float32),
        grid_spec=pltpu.PrefetchScalarGridSpec(
            num_scalar_prefetch=0,
            grid=(Vp // tv,),
            in_specs=[
                _spec((Bp, Hp), lambda j: (0, 0), n_buf=1),
                pl.BlockSpec((Hp, tv), lambda j: (0, j)),
                pl.BlockSpec((1, tv), lambda j: (0, j)),
            ],
            out_specs=pl.BlockSpec((Bp, tv), lambda j: (0, j))),
        compiler_params=pltpu.CompilerParams(
            dimension_semantics=("parallel",),
            vmem_limit_bytes=fc_vmem_limit),
    )(h_last, wfc_p, bfc_p)

    return logits_p[:B, :V]


# ---------------------------------------------------------------------------
# Pure-JAX f32 reference (same math as the PyTorch module).
# ---------------------------------------------------------------------------
def reference_forward(tokens, params):
    emb = jnp.take(params["embedding"], tokens, axis=0)      # (B, T, E)
    B, T, _ = emb.shape
    H = params["w_hh"].shape[1]
    wih_t = params["w_ih"].T
    whh_t = params["w_hh"].T
    bias = params["b_ih"] + params["b_hh"]

    h = jnp.zeros((B, H), jnp.float32)
    c = jnp.zeros((B, H), jnp.float32)
    for t in range(T):
        gates = emb[:, t, :] @ wih_t + h @ whh_t + bias
        i_g = jax.nn.sigmoid(gates[:, 0 * H:1 * H])
        f_g = jax.nn.sigmoid(gates[:, 1 * H:2 * H])
        g_g = jnp.tanh(gates[:, 2 * H:3 * H])
        o_g = jax.nn.sigmoid(gates[:, 3 * H:4 * H])
        c = f_g * c + i_g * g_g
        h = o_g * jnp.tanh(c)
    return h @ params["w_fc"].T + params["b_fc"]


def init_params(key, vocab_size, embedding_dim, hidden_dim):
    ks = jax.random.split(key, 7)
    H = hidden_dim
    scale = 1.0 / jnp.sqrt(jnp.float32(H))
    u = lambda k, shape: jax.random.uniform(k, shape, jnp.float32, -scale, scale)
    return {
        "embedding": jax.random.normal(ks[0], (vocab_size, embedding_dim),
                                       jnp.float32),
        "w_ih": u(ks[1], (4 * H, embedding_dim)),
        "w_hh": u(ks[2], (4 * H, H)),
        "b_ih": u(ks[3], (4 * H,)),
        "b_hh": u(ks[4], (4 * H,)),
        "w_fc": u(ks[5], (vocab_size, H)),
        "b_fc": u(ks[6], (vocab_size,)),
    }


if __name__ == "__main__":
    VOCAB = 32
    EMB = 16
    HIDDEN = 32
    N_GRAM = 8        # context length (seq len fed to the model)
    BATCH = 8

    key = jax.random.PRNGKey(0)
    pkey, tkey = jax.random.split(key)
    params = init_params(pkey, VOCAB, EMB, HIDDEN)
    tokens = jax.random.randint(tkey, (BATCH, N_GRAM), 0, VOCAB, dtype=jnp.int32)

    logits = lstm_language_model(tokens, params)
    logits = jax.block_until_ready(logits)

    ref = reference_forward(tokens, params)
    assert logits.shape == (BATCH, VOCAB)
    # bf16 MXU operands with f32 accumulation -> loosened tolerance.
    assert jnp.allclose(logits, ref, atol=3e-2, rtol=3e-2), (
        "mismatch vs reference: max abs diff = "
        f"{float(jnp.max(jnp.abs(logits - ref)))}")

    print("KERNEL_OK")
</pallas_src>

<mosaic_0001>
module attributes {stable_mosaic.version = 11 : i64} {
  func.func @fc_kernel(%arg0: i32, %arg1: memref<8x128xf32, #tpu.memory_space<vmem>>, %arg2: memref<128x128xbf16, #tpu.memory_space<vmem>>, %arg3: memref<1x128xf32, #tpu.memory_space<vmem>>, %arg4: memref<8x128xf32, #tpu.memory_space<vmem>>) attributes {dimension_semantics = [#tpu.dimension_semantics<parallel>], iteration_bounds = array<i64: 1>, scalar_prefetch = 0 : i64, scratch_operands = 0 : i64, tpu.core_type = #tpu.core_type<tc>, window_params = [{pipeline_mode = #tpu.pipeline_mode<synchronous>, transform_indices = @transform_0, window_bounds = array<i64: 8, 128>}, {transform_indices = @transform_1, window_bounds = array<i64: 128, 128>}, {transform_indices = @transform_2, window_bounds = array<i64: 1, 128>}, {transform_indices = @transform_3, window_bounds = array<i64: 8, 128>}]} {
    %c0 = arith.constant 0 : index
    %c0_0 = arith.constant 0 : index
    %0 = vector.load %arg1[%c0, %c0_0] : memref<8x128xf32, #tpu.memory_space<vmem>>, vector<8x128xf32>
    %1 = arith.truncf %0 : vector<8x128xf32> to vector<8x128xbf16>
    %c0_1 = arith.constant 0 : index
    %c0_2 = arith.constant 0 : index
    %2 = vector.load %arg2[%c0_1, %c0_2] : memref<128x128xbf16, #tpu.memory_space<vmem>>, vector<128x128xbf16>
    %cst = arith.constant dense<0.000000e+00> : vector<8x128xf32>
    %3 = tpu.matmul %1, %2, %cst {dimension_numbers = #tpu.dot_dimension_numbers<[1], [0], [0], [1], [0, 0, 1, 1], [], []>} : vector<8x128xbf16>, vector<128x128xbf16>, vector<8x128xf32> -> vector<8x128xf32>
    %c0_3 = arith.constant 0 : index
    %c0_4 = arith.constant 0 : index
    %4 = vector.load %arg3[%c0_3, %c0_4] : memref<1x128xf32, #tpu.memory_space<vmem>>, vector<1x128xf32>
    %5 = vector.broadcast %4 : vector<1x128xf32> to vector<8x128xf32>
    %6 = arith.addf %3, %5 : vector<8x128xf32>
    %c0_5 = arith.constant 0 : index
    %c0_6 = arith.constant 0 : index
    %7 = vector.load %arg4[%c0_5, %c0_6] : memref<8x128xf32, #tpu.memory_space<vmem>>, vector<8x128xf32>
    tpu.vector_store %arg4[%c0_5, %c0_6], %6 {strides = array<i32>} : memref<8x128xf32, #tpu.memory_space<vmem>>, vector<8x128xf32>,
    return
  }
  func.func @transform_0(%arg0: i32) -> (i32, i32) {
    %c0_i32 = arith.constant 0 : i32
    %c0_i32_0 = arith.constant 0 : i32
    %c0_i32_1 = arith.constant 0 : i32
    return %c0_i32, %c0_i32_0 : i32, i32
  }
  func.func @transform_1(%arg0: i32) -> (i32, i32) {
    %c0_i32 = arith.constant 0 : i32
    %c0_i32_0 = arith.constant 0 : i32
    return %c0_i32, %arg0 : i32, i32
  }
  func.func @transform_2(%arg0: i32) -> (i32, i32) {
    %c0_i32 = arith.constant 0 : i32
    %c0_i32_0 = arith.constant 0 : i32
    return %c0_i32, %arg0 : i32, i32
  }
  func.func @transform_3(%arg0: i32) -> (i32, i32) {
    %c0_i32 = arith.constant 0 : i32
    %c0_i32_0 = arith.constant 0 : i32
    return %c0_i32, %arg0 : i32, i32
  }
}

module attributes {stable_mosaic.version = 11 : i64} {
  func.func @lstm_kernel(%arg0: i32, %arg1: i32, %arg2: memref<8x8x128xbf16, #tpu.memory_space<vmem>>, %arg3: memref<128x512xbf16, #tpu.memory_space<vmem>>, %arg4: memref<128x512xbf16, #tpu.memory_space<vmem>>, %arg5: memref<1x512xf32, #tpu.memory_space<vmem>>, %arg6: memref<8x128xf32, #tpu.memory_space<vmem>>, %arg7: memref<8x128xf32, #tpu.memory_space<vmem>>, %arg8: memref<8x128xf32, #tpu.memory_space<vmem>>) attributes {dimension_semantics = [#tpu.dimension_semantics<parallel>, #tpu.dimension_semantics<arbitrary>], iteration_bounds = array<i64: 1, 1>, scalar_prefetch = 0 : i64, scratch_operands = 2 : i64, tpu.core_type = #tpu.core_type<tc>, window_params = [{transform_indices = @transform_0, window_bounds = array<i64: 8, 8, 128>}, {pipeline_mode = #tpu.pipeline_mode<synchronous>, transform_indices = @transform_1, window_bounds = array<i64: 128, 512>}, {pipeline_mode = #tpu.pipeline_mode<synchronous>, transform_indices = @transform_2, window_bounds = array<i64: 128, 512>}, {pipeline_mode = #tpu.pipeline_mode<synchronous>, transform_indices = @transform_3, window_bounds = array<i64: 1, 512>}, {transform_indices = @transform_4, window_bounds = array<i64: 8, 128>}]} {
    %c0_i32 = arith.constant 0 : i32
    %0 = arith.cmpi eq, %arg1, %c0_i32 : i32
    %1 = arith.extui %0 : i1 to i32
    %c0_i32_0 = arith.constant 0 : i32
    %2 = arith.cmpi ne, %1, %c0_i32_0 : i32
    scf.if %2 {
      %cst_100 = arith.constant 0.000000e+00 : f32
      %291 = vector.broadcast %cst_100 : f32 to vector<8x128xf32>
      %c0_101 = arith.constant 0 : index
      %c0_102 = arith.constant 0 : index
      %292 = vector.load %arg7[%c0_101, %c0_102] : memref<8x128xf32, #tpu.memory_space<vmem>>, vector<8x128xf32>
      tpu.vector_store %arg7[%c0_101, %c0_102], %291 {strides = array<i32>} : memref<8x128xf32, #tpu.memory_space<vmem>>, vector<8x128xf32>,
      %cst_103 = arith.constant 0.000000e+00 : f32
      %293 = vector.broadcast %cst_103 : f32 to vector<8x128xf32>
      %c0_104 = arith.constant 0 : index
      %c0_105 = arith.constant 0 : index
      %294 = vector.load %arg8[%c0_104, %c0_105] : memref<8x128xf32, #tpu.memory_space<vmem>>, vector<8x128xf32>
      tpu.vector_store %arg8[%c0_104, %c0_105], %293 {strides = array<i32>} : memref<8x128xf32, #tpu.memory_space<vmem>>, vector<8x128xf32>,
    } else {
    }
    %c0 = arith.constant 0 : index
    %c0_1 = arith.constant 0 : index
    %3 = vector.load %arg5[%c0, %c0_1] : memref<1x512xf32, #tpu.memory_space<vmem>>, vector<1x512xf32>
    %c0_2 = arith.constant 0 : index
    %c0_3 = arith.constant 0 : index
    %4 = vector.load %arg7[%c0_2, %c0_3] : memref<8x128xf32, #tpu.memory_space<vmem>>, vector<8x128xf32>
    %c0_4 = arith.constant 0 : index
    %c0_5 = arith.constant 0 : index
    %5 = vector.load %arg8[%c0_4, %c0_5] : memref<8x128xf32, #tpu.memory_space<vmem>>, vector<8x128xf32>
    %c0_6 = arith.constant 0 : index
    %c0_7 = arith.constant 0 : index
    %c0_8 = arith.constant 0 : index
    %6 = vector.load %arg2[%c0_6, %c0_7, %c0_8] : memref<8x8x128xbf16, #tpu.memory_space<vmem>>, vector<1x8x128xbf16>
    %7 = vector.shape_cast %6 : vector<1x8x128xbf16> to vector<8x128xbf16>
    %c0_9 = arith.constant 0 : index
    %c0_10 = arith.constant 0 : index
    %8 = vector.load %arg3[%c0_9, %c0_10] : memref<128x512xbf16, #tpu.memory_space<vmem>>, vector<128x512xbf16>
    %cst = arith.constant dense<0.000000e+00> : vector<8x512xf32>
    %9 = tpu.matmul %7, %8, %cst {dimension_numbers = #tpu.dot_dimension_numbers<[1], [0], [0], [1], [0, 0, 1, 1], [], []>} : vector<8x128xbf16>, vector<128x512xbf16>, vector<8x512xf32> -> vector<8x512xf32>
    %10 = vector.broadcast %3 : vector<1x512xf32> to vector<8x512xf32>
    %11 = arith.addf %9, %10 : vector<8x512xf32>
    %12 = arith.truncf %4 : vector<8x128xf32> to vector<8x128xbf16>
    %c0_11 = arith.constant 0 : index
    %c0_12 = arith.constant 0 : index
    %13 = vector.load %arg4[%c0_11, %c0_12] : memref<128x512xbf16, #tpu.memory_space<vmem>>, vector<128x512xbf16>
    %cst_13 = arith.constant dense<0.000000e+00> : vector<8x512xf32>
    %14 = tpu.matmul %12, %13, %cst_13 {dimension_numbers = #tpu.dot_dimension_numbers<[1], [0], [0], [1], [0, 0, 1, 1], [], []>} : vector<8x128xbf16>, vector<128x512xbf16>, vector<8x512xf32> -> vector<8x512xf32>
    %15 = arith.addf %11, %14 : vector<8x512xf32>
    %16 = vector.extract_strided_slice %15 {offsets = [0, 0], sizes = [8, 128], strides = [1, 1]} : vector<8x512xf32> to vector<8x128xf32>
    %17 = arith.negf %16 : vector<8x128xf32>
    %18 = math.exp %17 : vector<8x128xf32>
    %cst_14 = arith.constant 1.000000e+00 : f32
    %19 = vector.broadcast %cst_14 : f32 to vector<8x128xf32>
    %20 = arith.addf %19, %18 : vector<8x128xf32>
    %21 = arith.divf %19, %20 : vector<8x128xf32>
    %22 = vector.extract_strided_slice %15 {offsets = [0, 256], sizes = [8, 128], strides = [1, 1]} : vector<8x512xf32> to vector<8x128xf32>
    %23 = math.tanh %22 : vector<8x128xf32>
    %24 = arith.mulf %21, %23 : vector<8x128xf32>
    %25 = vector.extract_strided_slice %15 {offsets = [0, 128], sizes = [8, 128], strides = [1, 1]} : vector<8x512xf32> to vector<8x128xf32>
    %26 = arith.negf %25 : vector<8x128xf32>
    %27 = math.exp %26 : vector<8x128xf32>
    %cst_15 = arith.constant 1.000000e+00 : f32
    %28 = vector.broadcast %cst_15 : f32 to vector<8x128xf32>
    %29 = arith.addf %28, %27 : vector<8x128xf32>
    %30 = arith.divf %28, %29 : vector<8x128xf32>
    %31 = arith.mulf %30, %5 : vector<8x128xf32>
    %32 = arith.addf %31, %24 : vector<8x128xf32>
    %33 = vector.extract_strided_slice %15 {offsets = [0, 384], sizes = [8, 128], strides = [1, 1]} : vector<8x512xf32> to vector<8x128xf32>
    %34 = arith.negf %33 : vector<8x128xf32>
    %35 = math.exp %34 : vector<8x128xf32>
    %cst_16 = arith.constant 1.000000e+00 : f32
    %36 = vector.broadcast %cst_16 : f32 to vector<8x128xf32>
    %37 = arith.addf %36, %35 : vector<8x128xf32>
    %38 = arith.divf %36, %37 : vector<8x128xf32>
    %39 = math.tanh %32 : vector<8x128xf32>
    %40 = arith.mulf %38, %39 : vector<8x128xf32>
    %c1 = arith.constant 1 : index
    %c0_17 = arith.constant 0 : index
    %c0_18 = arith.constant 0 : index
    %41 = vector.load %arg2[%c1, %c0_17, %c0_18] : memref<8x8x128xbf16, #tpu.memory_space<vmem>>, vector<1x8x128xbf16>
    %42 = vector.shape_cast %41 : vector<1x8x128xbf16> to vector<8x128xbf16>
    %c0_19 = arith.constant 0 : index
    %c0_20 = arith.constant 0 : index
    %43 = vector.load %arg3[%c0_19, %c0_20] : memref<128x512xbf16, #tpu.memory_space<vmem>>, vector<128x512xbf16>
    %cst_21 = arith.constant dense<0.000000e+00> : vector<8x512xf32>
    %44 = tpu.matmul %42, %43, %cst_21 {dimension_numbers = #tpu.dot_dimension_numbers<[1], [0], [0], [1], [0, 0, 1, 1], [], []>} : vector<8x128xbf16>, vector<128x512xbf16>, vector<8x512xf32> -> vector<8x512xf32>
    %45 = vector.broadcast %3 : vector<1x512xf32> to vector<8x512xf32>
    %46 = arith.addf %44, %45 : vector<8x512xf32>
    %47 = arith.truncf %40 : vector<8x128xf32> to vector<8x128xbf16>
    %c0_22 = arith.constant 0 : index
    %c0_23 = arith.constant 0 : index
    %48 = vector.load %arg4[%c0_22, %c0_23] : memref<128x512xbf16, #tpu.memory_space<vmem>>, vector<128x512xbf16>
    %cst_24 = arith.constant dense<0.000000e+00> : vector<8x512xf32>
    %49 = tpu.matmul %47, %48, %cst_24 {dimension_numbers = #tpu.dot_dimension_numbers<[1], [0], [0], [1], [0, 0, 1, 1], [], []>} : vector<8x128xbf16>, vector<128x512xbf16>, vector<8x512xf32> -> vector<8x512xf32>
    %50 = arith.addf %46, %49 : vector<8x512xf32>
    %51 = vector.extract_strided_slice %50 {offsets = [0, 0], sizes = [8, 128], strides = [1, 1]} : vector<8x512xf32> to vector<8x128xf32>
    %52 = arith.negf %51 : vector<8x128xf32>
    %53 = math.exp %52 : vector<8x128xf32>
    %cst_25 = arith.constant 1.000000e+00 : f32
    %54 = vector.broadcast %cst_25 : f32 to vector<8x128xf32>
    %55 = arith.addf %54, %53 : vector<8x128xf32>
    %56 = arith.divf %54, %55 : vector<8x128xf32>
    %57 = vector.extract_strided_slice %50 {offsets = [0, 256], sizes = [8, 128], strides = [1, 1]} : vector<8x512xf32> to vector<8x128xf32>
    %58 = math.tanh %57 : vector<8x128xf32>
    %59 = arith.mulf %56, %58 : vector<8x128xf32>
    %60 = vector.extract_strided_slice %50 {offsets = [0, 128], sizes = [8, 128], strides = [1, 1]} : vector<8x512xf32> to vector<8x128xf32>
    %61 = arith.negf %60 : vector<8x128xf32>
    %62 = math.exp %61 : vector<8x128xf32>
    %cst_26 = arith.constant 1.000000e+00 : f32
    %63 = vector.broadcast %cst_26 : f32 to vector<8x128xf32>
    %64 = arith.addf %63, %62 : vector<8x128xf32>
    %65 = arith.divf %63, %64 : vector<8x128xf32>
    %66 = arith.mulf %65, %32 : vector<8x128xf32>
    %67 = arith.addf %66, %59 : vector<8x128xf32>
    %68 = vector.extract_strided_slice %50 {offsets = [0, 384], sizes = [8, 128], strides = [1, 1]} : vector<8x512xf32> to vector<8x128xf32>
    %69 = arith.negf %68 : vector<8x128xf32>
    %70 = math.exp %69 : vector<8x128xf32>
    %cst_27 = arith.constant 1.000000e+00 : f32
    %71 = vector.broadcast %cst_27 : f32 to vector<8x128xf32>
    %72 = arith.addf %71, %70 : vector<8x128xf32>
    %73 = arith.divf %71, %72 : vector<8x128xf32>
    %74 = math.tanh %67 : vector<8x128xf32>
    %75 = arith.mulf %73, %74 : vector<8x128xf32>
    %c2 = arith.constant 2 : index
    %c0_28 = arith.constant 0 : index
    %c0_29 = arith.constant 0 : index
    %76 = vector.load %arg2[%c2, %c0_28, %c0_29] : memref<8x8x128xbf16, #tpu.memory_space<vmem>>, vector<1x8x128xbf16>
    %77 = vector.shape_cast %76 : vector<1x8x128xbf16> to vector<8x128xbf16>
    %c0_30 = arith.constant 0 : index
    %c0_31 = arith.constant 0 : index
    %78 = vector.load %arg3[%c0_30, %c0_31] : memref<128x512xbf16, #tpu.memory_space<vmem>>, vector<128x512xbf16>
    %cst_32 = arith.constant dense<0.000000e+00> : vector<8x512xf32>
    %79 = tpu.matmul %77, %78, %cst_32 {dimension_numbers = #tpu.dot_dimension_numbers<[1], [0], [0], [1], [0, 0, 1, 1], [], []>} : vector<8x128xbf16>, vector<128x512xbf16>, vector<8x512xf32> -> vector<8x512xf32>
    %80 = vector.broadcast %3 : vector<1x512xf32> to vector<8x512xf32>
    %81 = arith.addf %79, %80 : vector<8x512xf32>
    %82 = arith.truncf %75 : vector<8x128xf32> to vector<8x128xbf16>
    %c0_33 = arith.constant 0 : index
    %c0_34 = arith.constant 0 : index
    %83 = vector.load %arg4[%c0_33, %c0_34] : memref<128x512xbf16, #tpu.memory_space<vmem>>, vector<128x512xbf16>
    %cst_35 = arith.constant dense<0.000000e+00> : vector<8x512xf32>
    %84 = tpu.matmul %82, %83, %cst_35 {dimension_numbers = #tpu.dot_dimension_numbers<[1], [0], [0], [1], [0, 0, 1, 1], [], []>} : vector<8x128xbf16>, vector<128x512xbf16>, vector<8x512xf32> -> vector<8x512xf32>
    %85 = arith.addf %81, %84 : vector<8x512xf32>
    %86 = vector.extract_strided_slice %85 {offsets = [0, 0], sizes = [8, 128], strides = [1, 1]} : vector<8x512xf32> to vector<8x128xf32>
    %87 = arith.negf %86 : vector<8x128xf32>
    %88 = math.exp %87 : vector<8x128xf32>
    %cst_36 = arith.constant 1.000000e+00 : f32
    %89 = vector.broadcast %cst_36 : f32 to vector<8x128xf32>
    %90 = arith.addf %89, %88 : vector<8x128xf32>
    %91 = arith.divf %89, %90 : vector<8x128xf32>
    %92 = vector.extract_strided_slice %85 {offsets = [0, 256], sizes = [8, 128], strides = [1, 1]} : vector<8x512xf32> to vector<8x128xf32>
    %93 = math.tanh %92 : vector<8x128xf32>
    %94 = arith.mulf %91, %93 : vector<8x128xf32>
    %95 = vector.extract_strided_slice %85 {offsets = [0, 128], sizes = [8, 128], strides = [1, 1]} : vector<8x512xf32> to vector<8x128xf32>
    %96 = arith.negf %95 : vector<8x128xf32>
    %97 = math.exp %96 : vector<8x128xf32>
    %cst_37 = arith.constant 1.000000e+00 : f32
    %98 = vector.broadcast %cst_37 : f32 to vector<8x128xf32>
    %99 = arith.addf %98, %97 : vector<8x128xf32>
    %100 = arith.divf %98, %99 : vector<8x128xf32>
    %101 = arith.mulf %100, %67 : vector<8x128xf32>
    %102 = arith.addf %101, %94 : vector<8x128xf32>
    %103 = vector.extract_strided_slice %85 {offsets = [0, 384], sizes = [8, 128], strides = [1, 1]} : vector<8x512xf32> to vector<8x128xf32>
    %104 = arith.negf %103 : vector<8x128xf32>
    %105 = math.exp %104 : vector<8x128xf32>
    %cst_38 = arith.constant 1.000000e+00 : f32
    %106 = vector.broadcast %cst_38 : f32 to vector<8x128xf32>
    %107 = arith.addf %106, %105 : vector<8x128xf32>
    %108 = arith.divf %106, %107 : vector<8x128xf32>
    %109 = math.tanh %102 : vector<8x128xf32>
    %110 = arith.mulf %108, %109 : vector<8x128xf32>
    %c3 = arith.constant 3 : index
    %c0_39 = arith.constant 0 : index
    %c0_40 = arith.constant 0 : index
    %111 = vector.load %arg2[%c3, %c0_39, %c0_40] : memref<8x8x128xbf16, #tpu.memory_space<vmem>>, vector<1x8x128xbf16>
    %112 = vector.shape_cast %111 : vector<1x8x128xbf16> to vector<8x128xbf16>
    %c0_41 = arith.constant 0 : index
    %c0_42 = arith.constant 0 : index
    %113 = vector.load %arg3[%c0_41, %c0_42] : memref<128x512xbf16, #tpu.memory_space<vmem>>, vector<128x512xbf16>
    %cst_43 = arith.constant dense<0.000000e+00> : vector<8x512xf32>
    %114 = tpu.matmul %112, %113, %cst_43 {dimension_numbers = #tpu.dot_dimension_numbers<[1], [0], [0], [1], [0, 0, 1, 1], [], []>} : vector<8x128xbf16>, vector<128x512xbf16>, vector<8x512xf32> -> vector<8x512xf32>
    %115 = vector.broadcast %3 : vector<1x512xf32> to vector<8x512xf32>
    %116 = arith.addf %114, %115 : vector<8x512xf32>
    %117 = arith.truncf %110 : vector<8x128xf32> to vector<8x128xbf16>
    %c0_44 = arith.constant 0 : index
    %c0_45 = arith.constant 0 : index
    %118 = vector.load %arg4[%c0_44, %c0_45] : memref<128x512xbf16, #tpu.memory_space<vmem>>, vector<128x512xbf16>
    %cst_46 = arith.constant dense<0.000000e+00> : vector<8x512xf32>
    %119 = tpu.matmul %117, %118, %cst_46 {dimension_numbers = #tpu.dot_dimension_numbers<[1], [0], [0], [1], [0, 0, 1, 1], [], []>} : vector<8x128xbf16>, vector<128x512xbf16>, vector<8x512xf32> -> vector<8x512xf32>
    %120 = arith.addf %116, %119 : vector<8x512xf32>
    %121 = vector.extract_strided_slice %120 {offsets = [0, 0], sizes = [8, 128], strides = [1, 1]} : vector<8x512xf32> to vector<8x128xf32>
    %122 = arith.negf %121 : vector<8x128xf32>
    %123 = math.exp %122 : vector<8x128xf32>
    %cst_47 = arith.constant 1.000000e+00 : f32
    %124 = vector.broadcast %cst_47 : f32 to vector<8x128xf32>
    %125 = arith.addf %124, %123 : vector<8x128xf32>
    %126 = arith.divf %124, %125 : vector<8x128xf32>
    %127 = vector.extract_strided_slice %120 {offsets = [0, 256], sizes = [8, 128], strides = [1, 1]} : vector<8x512xf32> to vector<8x128xf32>
    %128 = math.tanh %127 : vector<8x128xf32>
    %129 = arith.mulf %126, %128 : vector<8x128xf32>
    %130 = vector.extract_strided_slice %120 {offsets = [0, 128], sizes = [8, 128], strides = [1, 1]} : vector<8x512xf32> to vector<8x128xf32>
    %131 = arith.negf %130 : vector<8x128xf32>
    %132 = math.exp %131 : vector<8x128xf32>
    %cst_48 = arith.constant 1.000000e+00 : f32
    %133 = vector.broadcast %cst_48 : f32 to vector<8x128xf32>
    %134 = arith.addf %133, %132 : vector<8x128xf32>
    %135 = arith.divf %133, %134 : vector<8x128xf32>
    %136 = arith.mulf %135, %102 : vector<8x128xf32>
    %137 = arith.addf %136, %129 : vector<8x128xf32>
    %138 = vector.extract_strided_slice %120 {offsets = [0, 384], sizes = [8, 128], strides = [1, 1]} : vector<8x512xf32> to vector<8x128xf32>
    %139 = arith.negf %138 : vector<8x128xf32>
    %140 = math.exp %139 : vector<8x128xf32>
    %cst_49 = arith.constant 1.000000e+00 : f32
    %141 = vector.broadcast %cst_49 : f32 to vector<8x128xf32>
    %142 = arith.addf %141, %140 : vector<8x128xf32>
    %143 = arith.divf %141, %142 : vector<8x128xf32>
    %144 = math.tanh %137 : vector<8x128xf32>
    %145 = arith.mulf %143, %144 : vector<8x128xf32>
    %c4 = arith.constant 4 : index
    %c0_50 = arith.constant 0 : index
    %c0_51 = arith.constant 0 : index
    %146 = vector.load %arg2[%c4, %c0_50, %c0_51] : memref<8x8x128xbf16, #tpu.memory_space<vmem>>, vector<1x8x128xbf16>
    %147 = vector.shape_cast %146 : vector<1x8x128xbf16> to vector<8x128xbf16>
    %c0_52 = arith.constant 0 : index
    %c0_53 = arith.constant 0 : index
    %148 = vector.load %arg3[%c0_52, %c0_53] : memref<128x512xbf16, #tpu.memory_space<vmem>>, vector<128x512xbf16>
    %cst_54 = arith.constant dense<0.000000e+00> : vector<8x512xf32>
    %149 = tpu.matmul %147, %148, %cst_54 {dimension_numbers = #tpu.dot_dimension_numbers<[1], [0], [0], [1], [0, 0, 1, 1], [], []>} : vector<8x128xbf16>, vector<128x512xbf16>, vector<8x512xf32> -> vector<8x512xf32>
    %150 = vector.broadcast %3 : vector<1x512xf32> to vector<8x512xf32>
    %151 = arith.addf %149, %150 : vector<8x512xf32>
    %152 = arith.truncf %145 : vector<8x128xf32> to vector<8x128xbf16>
    %c0_55 = arith.constant 0 : index
    %c0_56 = arith.constant 0 : index
    %153 = vector.load %arg4[%c0_55, %c0_56] : memref<128x512xbf16, #tpu.memory_space<vmem>>, vector<128x512xbf16>
    %cst_57 = arith.constant dense<0.000000e+00> : vector<8x512xf32>
    %154 = tpu.matmul %152, %153, %cst_57 {dimension_numbers = #tpu.dot_dimension_numbers<[1], [0], [0], [1], [0, 0, 1, 1], [], []>} : vector<8x128xbf16>, vector<128x512xbf16>, vector<8x512xf32> -> vector<8x512xf32>
    %155 = arith.addf %151, %154 : vector<8x512xf32>
    %156 = vector.extract_strided_slice %155 {offsets = [0, 0], sizes = [8, 128], strides = [1, 1]} : vector<8x512xf32> to vector<8x128xf32>
    %157 = arith.negf %156 : vector<8x128xf32>
    %158 = math.exp %157 : vector<8x128xf32>
    %cst_58 = arith.constant 1.000000e+00 : f32
    %159 = vector.broadcast %cst_58 : f32 to vector<8x128xf32>
    %160 = arith.addf %159, %158 : vector<8x128xf32>
    %161 = arith.divf %159, %160 : vector<8x128xf32>
    %162 = vector.extract_strided_slice %155 {offsets = [0, 256], sizes = [8, 128], strides = [1, 1]} : vector<8x512xf32> to vector<8x128xf32>
    %163 = math.tanh %162 : vector<8x128xf32>
    %164 = arith.mulf %161, %163 : vector<8x128xf32>
    %165 = vector.extract_strided_slice %155 {offsets = [0, 128], sizes = [8, 128], strides = [1, 1]} : vector<8x512xf32> to vector<8x128xf32>
    %166 = arith.negf %165 : vector<8x128xf32>
    %167 = math.exp %166 : vector<8x128xf32>
    %cst_59 = arith.constant 1.000000e+00 : f32
    %168 = vector.broadcast %cst_59 : f32 to vector<8x128xf32>
    %169 = arith.addf %168, %167 : vector<8x128xf32>
    %170 = arith.divf %168, %169 : vector<8x128xf32>
    %171 = arith.mulf %170, %137 : vector<8x128xf32>
    %172 = arith.addf %171, %164 : vector<8x128xf32>
    %173 = vector.extract_strided_slice %155 {offsets = [0, 384], sizes = [8, 128], strides = [1, 1]} : vector<8x512xf32> to vector<8x128xf32>
    %174 = arith.negf %173 : vector<8x128xf32>
    %175 = math.exp %174 : vector<8x128xf32>
    %cst_60 = arith.constant 1.000000e+00 : f32
    %176 = vector.broadcast %cst_60 : f32 to vector<8x128xf32>
    %177 = arith.addf %176, %175 : vector<8x128xf32>
    %178 = arith.divf %176, %177 : vector<8x128xf32>
    %179 = math.tanh %172 : vector<8x128xf32>
    %180 = arith.mulf %178, %179 : vector<8x128xf32>
    %c5 = arith.constant 5 : index
    %c0_61 = arith.constant 0 : index
    %c0_62 = arith.constant 0 : index
    %181 = vector.load %arg2[%c5, %c0_61, %c0_62] : memref<8x8x128xbf16, #tpu.memory_space<vmem>>, vector<1x8x128xbf16>
    %182 = vector.shape_cast %181 : vector<1x8x128xbf16> to vector<8x128xbf16>
    %c0_63 = arith.constant 0 : index
    %c0_64 = arith.constant 0 : index
    %183 = vector.load %arg3[%c0_63, %c0_64] : memref<128x512xbf16, #tpu.memory_space<vmem>>, vector<128x512xbf16>
    %cst_65 = arith.constant dense<0.000000e+00> : vector<8x512xf32>
    %184 = tpu.matmul %182, %183, %cst_65 {dimension_numbers = #tpu.dot_dimension_numbers<[1], [0], [0], [1], [0, 0, 1, 1], [], []>} : vector<8x128xbf16>, vector<128x512xbf16>, vector<8x512xf32> -> vector<8x512xf32>
    %185 = vector.broadcast %3 : vector<1x512xf32> to vector<8x512xf32>
    %186 = arith.addf %184, %185 : vector<8x512xf32>
    %187 = arith.truncf %180 : vector<8x128xf32> to vector<8x128xbf16>
    %c0_66 = arith.constant 0 : index
    %c0_67 = arith.constant 0 : index
    %188 = vector.load %arg4[%c0_66, %c0_67] : memref<128x512xbf16, #tpu.memory_space<vmem>>, vector<128x512xbf16>
    %cst_68 = arith.constant dense<0.000000e+00> : vector<8x512xf32>
    %189 = tpu.matmul %187, %188, %cst_68 {dimension_numbers = #tpu.dot_dimension_numbers<[1], [0], [0], [1], [0, 0, 1, 1], [], []>} : vector<8x128xbf16>, vector<128x512xbf16>, vector<8x512xf32> -> vector<8x512xf32>
    %190 = arith.addf %186, %189 : vector<8x512xf32>
    %191 = vector.extract_strided_slice %190 {offsets = [0, 0], sizes = [8, 128], strides = [1, 1]} : vector<8x512xf32> to vector<8x128xf32>
    %192 = arith.negf %191 : vector<8x128xf32>
    %193 = math.exp %192 : vector<8x128xf32>
    %cst_69 = arith.constant 1.000000e+00 : f32
    %194 = vector.broadcast %cst_69 : f32 to vector<8x128xf32>
    %195 = arith.addf %194, %193 : vector<8x128xf32>
    %196 = arith.divf %194, %195 : vector<8x128xf32>
    %197 = vector.extract_strided_slice %190 {offsets = [0, 256], sizes = [8, 128], strides = [1, 1]} : vector<8x512xf32> to vector<8x128xf32>
    %198 = math.tanh %197 : vector<8x128xf32>
    %199 = arith.mulf %196, %198 : vector<8x128xf32>
    %200 = vector.extract_strided_slice %190 {offsets = [0, 128], sizes = [8, 128], strides = [1, 1]} : vector<8x512xf32> to vector<8x128xf32>
    %201 = arith.negf %200 : vector<8x128xf32>
    %202 = math.exp %201 : vector<8x128xf32>
    %cst_70 = arith.constant 1.000000e+00 : f32
    %203 = vector.broadcast %cst_70 : f32 to vector<8x128xf32>
    %204 = arith.addf %203, %202 : vector<8x128xf32>
    %205 = arith.divf %203, %204 : vector<8x128xf32>
    %206 = arith.mulf %205, %172 : vector<8x128xf32>
    %207 = arith.addf %206, %199 : vector<8x128xf32>
    %208 = vector.extract_strided_slice %190 {offsets = [0, 384], sizes = [8, 128], strides = [1, 1]} : vector<8x512xf32> to vector<8x128xf32>
    %209 = arith.negf %208 : vector<8x128xf32>
    %210 = math.exp %209 : vector<8x128xf32>
    %cst_71 = arith.constant 1.000000e+00 : f32
    %211 = vector.broadcast %cst_71 : f32 to vector<8x128xf32>
    %212 = arith.addf %211, %210 : vector<8x128xf32>
    %213 = arith.divf %211, %212 : vector<8x128xf32>
    %214 = math.tanh %207 : vector<8x128xf32>
    %215 = arith.mulf %213, %214 : vector<8x128xf32>
    %c6 = arith.constant 6 : index
    %c0_72 = arith.constant 0 : index
    %c0_73 = arith.constant 0 : index
    %216 = vector.load %arg2[%c6, %c0_72, %c0_73] : memref<8x8x128xbf16, #tpu.memory_space<vmem>>, vector<1x8x128xbf16>
    %217 = vector.shape_cast %216 : vector<1x8x128xbf16> to vector<8x128xbf16>
    %c0_74 = arith.constant 0 : index
    %c0_75 = arith.constant 0 : index
    %218 = vector.load %arg3[%c0_74, %c0_75] : memref<128x512xbf16, #tpu.memory_space<vmem>>, vector<128x512xbf16>
    %cst_76 = arith.constant dense<0.000000e+00> : vector<8x512xf32>
    %219 = tpu.matmul %217, %218, %cst_76 {dimension_numbers = #tpu.dot_dimension_numbers<[1], [0], [0], [1], [0, 0, 1, 1], [], []>} : vector<8x128xbf16>, vector<128x512xbf16>, vector<8x512xf32> -> vector<8x512xf32>
    %220 = vector.broadcast %3 : vector<1x512xf32> to vector<8x512xf32>
    %221 = arith.addf %219, %220 : vector<8x512xf32>
    %222 = arith.truncf %215 : vector<8x128xf32> to vector<8x128xbf16>
    %c0_77 = arith.constant 0 : index
    %c0_78 = arith.constant 0 : index
    %223 = vector.load %arg4[%c0_77, %c0_78] : memref<128x512xbf16, #tpu.memory_space<vmem>>, vector<128x512xbf16>
    %cst_79 = arith.constant dense<0.000000e+00> : vector<8x512xf32>
    %224 = tpu.matmul %222, %223, %cst_79 {dimension_numbers = #tpu.dot_dimension_numbers<[1], [0], [0], [1], [0, 0, 1, 1], [], []>} : vector<8x128xbf16>, vector<128x512xbf16>, vector<8x512xf32> -> vector<8x512xf32>
    %225 = arith.addf %221, %224 : vector<8x512xf32>
    %226 = vector.extract_strided_slice %225 {offsets = [0, 0], sizes = [8, 128], strides = [1, 1]} : vector<8x512xf32> to vector<8x128xf32>
    %227 = arith.negf %226 : vector<8x128xf32>
    %228 = math.exp %227 : vector<8x128xf32>
    %cst_80 = arith.constant 1.000000e+00 : f32
    %229 = vector.broadcast %cst_80 : f32 to vector<8x128xf32>
    %230 = arith.addf %229, %228 : vector<8x128xf32>
    %231 = arith.divf %229, %230 : vector<8x128xf32>
    %232 = vector.extract_strided_slice %225 {offsets = [0, 256], sizes = [8, 128], strides = [1, 1]} : vector<8x512xf32> to vector<8x128xf32>
    %233 = math.tanh %232 : vector<8x128xf32>
    %234 = arith.mulf %231, %233 : vector<8x128xf32>
    %235 = vector.extract_strided_slice %225 {offsets = [0, 128], sizes = [8, 128], strides = [1, 1]} : vector<8x512xf32> to vector<8x128xf32>
    %236 = arith.negf %235 : vector<8x128xf32>
    %237 = math.exp %236 : vector<8x128xf32>
    %cst_81 = arith.constant 1.000000e+00 : f32
    %238 = vector.broadcast %cst_81 : f32 to vector<8x128xf32>
    %239 = arith.addf %238, %237 : vector<8x128xf32>
    %240 = arith.divf %238, %239 : vector<8x128xf32>
    %241 = arith.mulf %240, %207 : vector<8x128xf32>
    %242 = arith.addf %241, %234 : vector<8x128xf32>
    %243 = vector.extract_strided_slice %225 {offsets = [0, 384], sizes = [8, 128], strides = [1, 1]} : vector<8x512xf32> to vector<8x128xf32>
    %244 = arith.negf %243 : vector<8x128xf32>
    %245 = math.exp %244 : vector<8x128xf32>
    %cst_82 = arith.constant 1.000000e+00 : f32
    %246 = vector.broadcast %cst_82 : f32 to vector<8x128xf32>
    %247 = arith.addf %246, %245 : vector<8x128xf32>
    %248 = arith.divf %246, %247 : vector<8x128xf32>
    %249 = math.tanh %242 : vector<8x128xf32>
    %250 = arith.mulf %248, %249 : vector<8x128xf32>
    %c7 = arith.constant 7 : index
    %c0_83 = arith.constant 0 : index
    %c0_84 = arith.constant 0 : index
    %251 = vector.load %arg2[%c7, %c0_83, %c0_84] : memref<8x8x128xbf16, #tpu.memory_space<vmem>>, vector<1x8x128xbf16>
    %252 = vector.shape_cast %251 : vector<1x8x128xbf16> to vector<8x128xbf16>
    %c0_85 = arith.constant 0 : index
    %c0_86 = arith.constant 0 : index
    %253 = vector.load %arg3[%c0_85, %c0_86] : memref<128x512xbf16, #tpu.memory_space<vmem>>, vector<128x512xbf16>
    %cst_87 = arith.constant dense<0.000000e+00> : vector<8x512xf32>
    %254 = tpu.matmul %252, %253, %cst_87 {dimension_numbers = #tpu.dot_dimension_numbers<[1], [0], [0], [1], [0, 0, 1, 1], [], []>} : vector<8x128xbf16>, vector<128x512xbf16>, vector<8x512xf32> -> vector<8x512xf32>
    %255 = vector.broadcast %3 : vector<1x512xf32> to vector<8x512xf32>
    %256 = arith.addf %254, %255 : vector<8x512xf32>
    %257 = arith.truncf %250 : vector<8x128xf32> to vector<8x128xbf16>
    %c0_88 = arith.constant 0 : index
    %c0_89 = arith.constant 0 : index
    %258 = vector.load %arg4[%c0_88, %c0_89] : memref<128x512xbf16, #tpu.memory_space<vmem>>, vector<128x512xbf16>
    %cst_90 = arith.constant dense<0.000000e+00> : vector<8x512xf32>
    %259 = tpu.matmul %257, %258, %cst_90 {dimension_numbers = #tpu.dot_dimension_numbers<[1], [0], [0], [1], [0, 0, 1, 1], [], []>} : vector<8x128xbf16>, vector<128x512xbf16>, vector<8x512xf32> -> vector<8x512xf32>
    %260 = arith.addf %256, %259 : vector<8x512xf32>
    %261 = vector.extract_strided_slice %260 {offsets = [0, 0], sizes = [8, 128], strides = [1, 1]} : vector<8x512xf32> to vector<8x128xf32>
    %262 = arith.negf %261 : vector<8x128xf32>
    %263 = math.exp %262 : vector<8x128xf32>
    %cst_91 = arith.constant 1.000000e+00 : f32
    %264 = vector.broadcast %cst_91 : f32 to vector<8x128xf32>
    %265 = arith.addf %264, %263 : vector<8x128xf32>
    %266 = arith.divf %264, %265 : vector<8x128xf32>
    %267 = vector.extract_strided_slice %260 {offsets = [0, 256], sizes = [8, 128], strides = [1, 1]} : vector<8x512xf32> to vector<8x128xf32>
    %268 = math.tanh %267 : vector<8x128xf32>
    %269 = arith.mulf %266, %268 : vector<8x128xf32>
    %270 = vector.extract_strided_slice %260 {offsets = [0, 128], sizes = [8, 128], strides = [1, 1]} : vector<8x512xf32> to vector<8x128xf32>
    %271 = arith.negf %270 : vector<8x128xf32>
    %272 = math.exp %271 : vector<8x128xf32>
    %cst_92 = arith.constant 1.000000e+00 : f32
    %273 = vector.broadcast %cst_92 : f32 to vector<8x128xf32>
    %274 = arith.addf %273, %272 : vector<8x128xf32>
    %275 = arith.divf %273, %274 : vector<8x128xf32>
    %276 = arith.mulf %275, %242 : vector<8x128xf32>
    %277 = arith.addf %276, %269 : vector<8x128xf32>
    %278 = vector.extract_strided_slice %260 {offsets = [0, 384], sizes = [8, 128], strides = [1, 1]} : vector<8x512xf32> to vector<8x128xf32>
    %279 = arith.negf %278 : vector<8x128xf32>
    %280 = math.exp %279 : vector<8x128xf32>
    %cst_93 = arith.constant 1.000000e+00 : f32
    %281 = vector.broadcast %cst_93 : f32 to vector<8x128xf32>
    %282 = arith.addf %281, %280 : vector<8x128xf32>
    %283 = arith.divf %281, %282 : vector<8x128xf32>
    %284 = math.tanh %277 : vector<8x128xf32>
    %285 = arith.mulf %283, %284 : vector<8x128xf32>
    %c0_94 = arith.constant 0 : index
    %c0_95 = arith.constant 0 : index
    %286 = vector.load %arg7[%c0_94, %c0_95] : memref<8x128xf32, #tpu.memory_space<vmem>>, vector<8x128xf32>
    tpu.vector_store %arg7[%c0_94, %c0_95], %285 {strides = array<i32>} : memref<8x128xf32, #tpu.memory_space<vmem>>, vector<8x128xf32>,
    %c0_96 = arith.constant 0 : index
    %c0_97 = arith.constant 0 : index
    %287 = vector.load %arg8[%c0_96, %c0_97] : memref<8x128xf32, #tpu.memory_space<vmem>>, vector<8x128xf32>
    tpu.vector_store %arg8[%c0_96, %c0_97], %277 {strides = array<i32>} : memref<8x128xf32, #tpu.memory_space<vmem>>, vector<8x128xf32>,
    %c0_i32_98 = arith.constant 0 : i32
    %288 = arith.cmpi eq, %arg1, %c0_i32_98 : i32
    %289 = arith.extui %288 : i1 to i32
    %c0_i32_99 = arith.constant 0 : i32
    %290 = arith.cmpi ne, %289, %c0_i32_99 : i32
    scf.if %290 {
      %c0_100 = arith.constant 0 : index
      %c0_101 = arith.constant 0 : index
      %291 = vector.load %arg6[%c0_100, %c0_101] : memref<8x128xf32, #tpu.memory_space<vmem>>, vector<8x128xf32>
      tpu.vector_store %arg6[%c0_100, %c0_101], %285 {strides = array<i32>} : memref<8x128xf32, #tpu.memory_space<vmem>>, vector<8x128xf32>,
    } else {
    }
    return
  }
  func.func @transform_0(%arg0: i32, %arg1: i32) -> (i32, i32, i32) {
    %c0_i32 = arith.constant 0 : i32
    %c0_i32_0 = arith.constant 0 : i32
    return %arg1, %arg0, %c0_i32 : i32, i32, i32
  }
  func.func @transform_1(%arg0: i32, %arg1: i32) -> (i32, i32) {
    %c0_i32 = arith.constant 0 : i32
    %c0_i32_0 = arith.constant 0 : i32
    %c0_i32_1 = arith.constant 0 : i32
    return %c0_i32, %c0_i32_0 : i32, i32
  }
  func.func @transform_2(%arg0: i32, %arg1: i32) -> (i32, i32) {
    %c0_i32 = arith.constant 0 : i32
    %c0_i32_0 = arith.constant 0 : i32
    %c0_i32_1 = arith.constant 0 : i32
    return %c0_i32, %c0_i32_0 : i32, i32
  }
  func.func @transform_3(%arg0: i32, %arg1: i32) -> (i32, i32) {
    %c0_i32 = arith.constant 0 : i32
    %c0_i32_0 = arith.constant 0 : i32
    %c0_i32_1 = arith.constant 0 : i32
    return %c0_i32, %c0_i32_0 : i32, i32
  }
  func.func @transform_4(%arg0: i32, %arg1: i32) -> (i32, i32) {
    %c0_i32 = arith.constant 0 : i32
    %c0_i32_0 = arith.constant 0 : i32
    return %arg0, %c0_i32 : i32, i32
  }
}

</mosaic_0001>

<llo_original>
// kernel: lstm_language_model.3
$region0: #{lstm_language_model.3}
  #allocation0 [shape = 'u32[]', space=smem, size = 0x4, offset = 0x4, fixed_abs, tag = 'smem constant byte address 0x4 - core index']
  #allocation1 [shape = 'u32[144,128]{1,0:T(1,128)}', space=vmem, size = 0x12000, scoped, tag = 'internal scratch']
  %s0 = inlined_call_operand.vmem [shape: f32[8,128], index: 0, kind: input, shape index: {}]
  %s1 = inlined_call_operand.vmem [shape: bf16[128,128], index: 1, kind: input, shape index: {}]
  %s2 = inlined_call_operand.vmem [shape: f32[1,128], index: 2, kind: input, shape index: {}]
  %s3 = inlined_call_operand.hbm [shape: f32[8,128], index: 3, kind: output, shape index: {}]
  %s4 = sld [smem:[#allocation0]]
  $region22: #{lstm_language_model.3} parent=0
    _
  %s6 = ssub.s32 1, %s4
  %s7 = scalar_select 0, %s6, %s4
  $region1: #{lstm_language_model.3} parent=0
    #allocation2 [shape = 'u8[4096]{0}', space=vmem, size = 0x1000, scoped, tag = 'output window, operand 0, single buffered']
    #allocation3 [shape = 's32[1]{0}', space=sflag, size = 0x4, scoped, tag = 'scoped memory for lstm_language_model.3']
    %8 = vsyncpa [#allocation3], 0
    // Predicated region
    $region2: #{lstm_language_model.3} parent=1 // pred_check
      _
    $region3: #{lstm_language_model.3} parent=1 // pred_check_branch
      %10 = sbr.rel (0) target = $region5
    $region4: #{lstm_language_model.3} parent=1 // pred_region
      _
    $region5: #{lstm_language_model.3} parent=1 // pred_fallthru
      _
    // Predicated region
    $region6: #{lstm_language_model.3} parent=1 // pred_check
      _
    $region7: #{lstm_language_model.3} parent=1 // pred_check_branch
      %12 = sbr.rel (0) target = $region9
    $region8: #{lstm_language_model.3} parent=1 // pred_region
      _
    $region9: #{lstm_language_model.3} parent=1 // pred_fallthru
      _
    // Predicated region
    $region10: #{lstm_language_model.3} parent=1 // pred_check
      _
    $region11: #{lstm_language_model.3} parent=1 // pred_check_branch
      %14 = sbr.rel (0) target = $region13
    $region12: #{lstm_language_model.3} parent=1 // pred_region
      _
    $region13: #{lstm_language_model.3} parent=1 // pred_fallthru
      _
    %v16 = vld [vmem:[%s0] sm:$0xff]
    %v17 = vpack.c.bf16 %v16, %v16
    %v18 = vld [vmem:[%s1] sm:$0xf]
    %v19 = vld [vmem:[%s1 + $0x4] sm:$0xf]
    %v20 = vld [vmem:[%s1 + $0x8] sm:$0xf]
    %v21 = vld [vmem:[%s1 + $0xc] sm:$0xf]
    %v22 = vld [vmem:[%s1 + $0x10] sm:$0xf]
    %v23 = vld [vmem:[%s1 + $0x14] sm:$0xf]
    %v24 = vld [vmem:[%s1 + $0x18] sm:$0xf]
    %v25 = vld [vmem:[%s1 + $0x1c] sm:$0xf]
    %v26 = vld [vmem:[%s1 + $0x20] sm:$0xf]
    %v27 = vld [vmem:[%s1 + $0x24] sm:$0xf]
    %v28 = vld [vmem:[%s1 + $0x28] sm:$0xf]
    %v29 = vld [vmem:[%s1 + $0x2c] sm:$0xf]
    %v30 = vld [vmem:[%s1 + $0x30] sm:$0xf]
    %v31 = vld [vmem:[%s1 + $0x34] sm:$0xf]
    %v32 = vld [vmem:[%s1 + $0x38] sm:$0xf]
    %v33 = vld [vmem:[%s1 + $0x3c] sm:$0xf]
    %v34 = vld [vmem:[%s2] sm:$0x1]
    %v36 = vlaneseq
    %v37 = vshrl.u32 %v36, 7
    %v38 = vsub.s32 0, %v37
    %v39 = vrot.slane %v34, %v38
    %v57 = vunpack.c.l.b16 %v18
    %v58 = vunpack.c.l.b16 %v19
    %v59 = vunpack.c.l.b16 %v20
    %v60 = vunpack.c.l.b16 %v21
    %v61 = vunpack.c.l.b16 %v22
    %v62 = vunpack.c.l.b16 %v23
    %v63 = vunpack.c.l.b16 %v24
    %v64 = vunpack.c.l.b16 %v25
    %v65 = vunpack.c.l.b16 %v26
    %v66 = vunpack.c.l.b16 %v27
    %v67 = vunpack.c.l.b16 %v28
    %v68 = vunpack.c.l.b16 %v29
    %v69 = vunpack.c.l.b16 %v30
    %v70 = vunpack.c.l.b16 %v31
    %v71 = vunpack.c.l.b16 %v32
    %v72 = vunpack.c.l.b16 %v33
    %v73 = vpack.c.b16 %v58, %v57
    %v74 = vpack.c.b16 %v60, %v59
    %v75 = vpack.c.b16 %v62, %v61
    %v76 = vpack.c.b16 %v64, %v63
    %v77 = vpack.c.b16 %v66, %v65
    %v78 = vpack.c.b16 %v68, %v67
    %v79 = vpack.c.b16 %v70, %v69
    %v80 = vpack.c.b16 %v72, %v71
    %89 = vmatprep.subr.bf16.mxu0 0
    %90 = vmatpush1.bf16.msra.mxu0 %v80
    %91 = vmatprep.subr.bf16.mxu0 0
    %92 = vmatpush1.bf16.msra.mxu0 %v79
    %93 = vmatprep.subr.bf16.mxu0 0
    %94 = vmatpush1.bf16.msra.mxu0 %v78
    %95 = vmatprep.subr.bf16.mxu0 0
    %96 = vmatpush1.bf16.msra.mxu0 %v77
    %97 = vmatprep.subr.bf16.mxu0 0
    %98 = vmatpush1.bf16.msra.mxu0 %v76
    %99 = vmatprep.subr.bf16.mxu0 0
    %100 = vmatpush1.bf16.msra.mxu0 %v75
    %101 = vmatprep.subr.bf16.mxu0 0
    %102 = vmatpush1.bf16.msra.mxu0 %v74
    %103 = vmatprep.subr.bf16.mxu0 0
    %104 = vmatpush1.bf16.msra.mxu0 %v73
    %105 = vmatprep.subr.bf16.mxu0 0
    %106 = vmatpush2.bf16.msra.mxu0 0
    %107 = vmatprep.subr.bf16.mxu0 0
    %108 = vmatpush2.bf16.msra.mxu0 0
    %109 = vmatprep.subr.bf16.mxu0 0
    %110 = vmatpush2.bf16.msra.mxu0 0
    %111 = vmatprep.subr.bf16.mxu0 0
    %112 = vmatpush2.bf16.msra.mxu0 0
    %113 = vmatprep.subr.bf16.mxu0 0
    %114 = vmatpush2.bf16.msra.mxu0 0
    %115 = vmatprep.subr.bf16.mxu0 0
    %116 = vmatpush2.bf16.msra.mxu0 0
    %117 = vmatprep.subr.bf16.mxu0 0
    %118 = vmatpush2.bf16.msra.mxu0 0
    %119 = vmatprep.subr.bf16.mxu0 0
    %120 = vmatpush2.bf16.msra.mxu0 0
    %121 = vmatprep.mubr.bf16.mxu0 0
    %122 = vmatmul.mubr.bf16.gmra.mxu0 %v17
    %v123 = vpop.f32.mrf.mxu0
    %v124 = vadd.f32 %v39, %v123
    %v125 = vpop.f32.mrf.mxu0
    %v126 = vpop.f32.mrf.mxu0
    %v127 = vpop.f32.mrf.mxu0
    %128 = vdwg.mxu0
    %129 = vst [vmem:[#allocation2] sm:$0xff] %v124
    // Predicated region
    $region14: #{lstm_language_model.3} parent=1 // pred_check
      _
    $region15: #{lstm_language_model.3} parent=1 // pred_check_branch
      %131 = sbr.rel (0) target = $region17
    $region16: #{lstm_language_model.3} parent=1 // pred_region
      %s133 = ssub.s32 128, 128
      %134 = vsyncadd [#allocation3], %s133
      %s136 = sshll.u32 [#allocation2], 4
      %s137 = int_to_ptr.vmem [resolvable:$true] %s136
      %139 = dma.vmem_to_hbm [thread:$0]  %s137, 128, %s3, [#allocation3]
    $region17: #{lstm_language_model.3} parent=1 // pred_fallthru
      _
    // Predicated region
    $region18: #{lstm_language_model.3} parent=1 // pred_check
      _
    $region19: #{lstm_language_model.3} parent=1 // pred_check_branch
      %141 = sbr.rel (0) target = $region21
    $region20: #{lstm_language_model.3} parent=1 // pred_region
      %142 = dma.done [#allocation3], 128
    $region21: #{lstm_language_model.3} parent=1 // pred_fallthru
      _
    %143 = vsyncpa [#allocation3], 1

// kernel: lstm_language_model.2
$region0: #{lstm_language_model.2}
  #allocation0 [shape = 'u32[]', space=smem, size = 0x4, offset = 0x4, fixed_abs, tag = 'smem constant byte address 0x4 - core index']
  #allocation1 [shape = 'u32[144,128]{1,0:T(1,128)}', space=vmem, size = 0x12000, scoped, tag = 'internal scratch']
  #allocation2 [shape = 'f32[8,128]{1,0:T(8,128)}', space=vmem, size = 0x1000, scoped, tag = 'scratch operand']
  #allocation3 [shape = 'f32[8,128]{1,0:T(8,128)}', space=vmem, size = 0x1000, scoped, tag = 'scratch operand']
  %s0 = inlined_call_operand.vmem [shape: bf16[8,8,128], index: 0, kind: input, shape index: {}]
  %s1 = inlined_call_operand.vmem [shape: bf16[128,512], index: 1, kind: input, shape index: {}]
  %s2 = inlined_call_operand.vmem [shape: bf16[128,512], index: 2, kind: input, shape index: {}]
  %s3 = inlined_call_operand.vmem [shape: f32[1,512], index: 3, kind: input, shape index: {}]
  %s4 = inlined_call_operand.vmem [shape: f32[8,128], index: 4, kind: output, shape index: {}]
  %s5 = sld [smem:[#allocation0]]
  $region34: #{lstm_language_model.2} parent=0
    _
  %s7 = ssub.s32 1, %s5
  %s8 = scalar_select 0, %s7, %s5
  // Predicated region
  $region2: #{lstm_language_model.2} parent=0 // pred_check
    _
  $region3: #{lstm_language_model.2} parent=0 // pred_check_branch
    %10 = sbr.rel (0) target = $region5
  $region4: #{lstm_language_model.2} parent=0 // pred_region
    _
  $region5: #{lstm_language_model.2} parent=0 // pred_fallthru
    _
  // Predicated region
  $region6: #{lstm_language_model.2} parent=0 // pred_check
    _
  $region7: #{lstm_language_model.2} parent=0 // pred_check_branch
    %12 = sbr.rel (0) target = $region9
  $region8: #{lstm_language_model.2} parent=0 // pred_region
    _
  $region9: #{lstm_language_model.2} parent=0 // pred_fallthru
    _
  // Predicated region
  $region10: #{lstm_language_model.2} parent=0 // pred_check
    _
  $region11: #{lstm_language_model.2} parent=0 // pred_check_branch
    %14 = sbr.rel (0) target = $region13
  $region12: #{lstm_language_model.2} parent=0 // pred_region
    _
  $region13: #{lstm_language_model.2} parent=0 // pred_fallthru
    _
  // Predicated region
  $region14: #{lstm_language_model.2} parent=0 // pred_check
    _
  $region15: #{lstm_language_model.2} parent=0 // pred_check_branch
    %16 = sbr.rel (0) target = $region17
  $region16: #{lstm_language_model.2} parent=0 // pred_region
    _
  $region17: #{lstm_language_model.2} parent=0 // pred_fallthru
    _
  %p18 = scmp.eq.s32.totalorder 0, 0
  // Predicated region
  $region18: #{lstm_language_model.2} parent=0 // pred_check
    %p19 = pneg %p18
  $region19: #{lstm_language_model.2} parent=0 // pred_check_branch
    %21 = sbr.rel (%p19) target = $region21
  $region20: #{lstm_language_model.2} parent=0 // pred_region
    %22 = vst [vmem:[#allocation2] sm:$0xff] 0.0
    %23 = vst [vmem:[#allocation3] sm:$0xff] 0.0
  $region21: #{lstm_language_model.2} parent=0 // pred_fallthru
    _
  %v24 = vld [vmem:[%s3] sm:$0xf]
  %v25 = vld [vmem:[#allocation2] sm:$0xff]
  %v26 = vld [vmem:[#allocation3] sm:$0xff]
  %v27 = vld [vmem:[%s0] sm:$0xf]
  %v28 = vld [vmem:[%s1] sm:$0xff]
  %v29 = vld [vmem:[%s1 + $0x8] sm:$0xff]
  %v30 = vld [vmem:[%s1 + $0x10] sm:$0xff]
  %v31 = vld [vmem:[%s1 + $0x18] sm:$0xff]
  %v32 = vld [vmem:[%s1 + $0x20] sm:$0xff]
  %v33 = vld [vmem:[%s1 + $0x28] sm:$0xff]
  %v34 = vld [vmem:[%s1 + $0x30] sm:$0xff]
  %v35 = vld [vmem:[%s1 + $0x38] sm:$0xff]
  %v36 = vld [vmem:[%s1 + $0x40] sm:$0xff]
  %v37 = vld [vmem:[%s1 + $0x48] sm:$0xff]
  %v38 = vld [vmem:[%s1 + $0x50] sm:$0xff]
  %v39 = vld [vmem:[%s1 + $0x58] sm:$0xff]
  %v40 = vld [vmem:[%s1 + $0x60] sm:$0xff]
  %v41 = vld [vmem:[%s1 + $0x68] sm:$0xff]
  %v42 = vld [vmem:[%s1 + $0x70] sm:$0xff]
  %v43 = vld [vmem:[%s1 + $0x78] sm:$0xff]
  %v44 = vld [vmem:[%s1 + $0x80] sm:$0xff]
  %v45 = vld [vmem:[%s1 + $0x88] sm:$0xff]
  %v46 = vld [vmem:[%s1 + $0x90] sm:$0xff]
  %v47 = vld [vmem:[%s1 + $0x98] sm:$0xff]
  %v48 = vld [vmem:[%s1 + $0xa0] sm:$0xff]
  %v49 = vld [vmem:[%s1 + $0xa8] sm:$0xff]
  %v50 = vld [vmem:[%s1 + $0xb0] sm:$0xff]
  %v51 = vld [vmem:[%s1 + $0xb8] sm:$0xff]
  %v52 = vld [vmem:[%s1 + $0xc0] sm:$0xff]
  %v53 = vld [vmem:[%s1 + $0xc8] sm:$0xff]
  %v54 = vld [vmem:[%s1 + $0xd0] sm:$0xff]
  %v55 = vld [vmem:[%s1 + $0xd8] sm:$0xff]
  %v56 = vld [vmem:[%s1 + $0xe0] sm:$0xff]
  %v57 = vld [vmem:[%s1 + $0xe8] sm:$0xff]
  %v58 = vld [vmem:[%s1 + $0xf0] sm:$0xff]
  %v59 = vld [vmem:[%s1 + $0xf8] sm:$0xff]
  %v61 = vlaneseq
  %v62 = vshrl.u32 %v61, 7
  %v63 = vsub.s32 0, %v62
  %v64 = vrot.slane %v24, %v63
  %v65 = vlaneseq
  %v66 = vshrl.u32 %v65, 7
  %v67 = vsub.s32 1, %v66
  %v68 = vrot.slane %v24, %v67
  %v69 = vlaneseq
  %v70 = vshrl.u32 %v69, 7
  %v71 = vsub.s32 2, %v70
  %v72 = vrot.slane %v24, %v71
  %v73 = vlaneseq
  %v74 = vshrl.u32 %v73, 7
  %v75 = vsub.s32 3, %v74
  %v76 = vrot.slane %v24, %v75
  %v113 = vunpack.c.l.b16 %v28
  %v114 = vunpack.c.h.b16 %v28
  %v115 = vunpack.c.l.b16 %v29
  %v116 = vunpack.c.h.b16 %v29
  %v117 = vunpack.c.l.b16 %v30
  %v118 = vunpack.c.h.b16 %v30
  %v119 = vunpack.c.l.b16 %v31
  %v120 = vunpack.c.h.b16 %v31
  %v121 = vunpack.c.l.b16 %v32
  %v122 = vunpack.c.h.b16 %v32
  %v123 = vunpack.c.l.b16 %v33
  %v124 = vunpack.c.h.b16 %v33
  %v125 = vunpack.c.l.b16 %v34
  %v126 = vunpack.c.h.b16 %v34
  %v127 = vunpack.c.l.b16 %v35
  %v128 = vunpack.c.h.b16 %v35
  %v129 = vunpack.c.l.b16 %v36
  %v130 = vunpack.c.h.b16 %v36
  %v131 = vunpack.c.l.b16 %v37
  %v132 = vunpack.c.h.b16 %v37
  %v133 = vunpack.c.l.b16 %v38
  %v134 = vunpack.c.h.b16 %v38
  %v135 = vunpack.c.l.b16 %v39
  %v136 = vunpack.c.h.b16 %v39
  %v137 = vunpack.c.l.b16 %v40
  %v138 = vunpack.c.h.b16 %v40
  %v139 = vunpack.c.l.b16 %v41
  %v140 = vunpack.c.h.b16 %v41
  %v141 = vunpack.c.l.b16 %v42
  %v142 = vunpack.c.h.b16 %v42
  %v143 = vunpack.c.l.b16 %v43
  %v144 = vunpack.c.h.b16 %v43
  %v145 = vunpack.c.l.b16 %v44
  %v146 = vunpack.c.h.b16 %v44
  %v147 = vunpack.c.l.b16 %v45
  %v148 = vunpack.c.h.b16 %v45
  %v149 = vunpack.c.l.b16 %v46
  %v150 = vunpack.c.h.b16 %v46
  %v151 = vunpack.c.l.b16 %v47
  %v152 = vunpack.c.h.b16 %v47
  %v153 = vunpack.c.l.b16 %v48
  %v154 = vunpack.c.h.b16 %v48
  %v155 = vunpack.c.l.b16 %v49
  %v156 = vunpack.c.h.b16 %v49
  %v157 = vunpack.c.l.b16 %v50
  %v158 = vunpack.c.h.b16 %v50
  %v159 = vunpack.c.l.b16 %v51
  %v160 = vunpack.c.h.b16 %v51
  %v161 = vunpack.c.l.b16 %v52
  %v162 = vunpack.c.h.b16 %v52
  %v163 = vunpack.c.l.b16 %v53
  %v164 = vunpack.c.h.b16 %v53
  %v165 = vunpack.c.l.b16 %v54
  %v166 = vunpack.c.h.b16 %v54
  %v167 = vunpack.c.l.b16 %v55
  %v168 = vunpack.c.h.b16 %v55
  %v169 = vunpack.c.l.b16 %v56
  %v170 = vunpack.c.h.b16 %v56
  %v171 = vunpack.c.l.b16 %v57
  %v172 = vunpack.c.h.b16 %v57
  %v173 = vunpack.c.l.b16 %v58
  %v174 = vunpack.c.h.b16 %v58
  %v175 = vunpack.c.l.b16 %v59
  %v176 = vunpack.c.h.b16 %v59
  %v177 = vpack.c.b16 %v117, %v113
  %v178 = vpack.c.b16 %v118, %v114
  %v179 = vpack.c.b16 %v119, %v115
  %v180 = vpack.c.b16 %v120, %v116
  %v181 = vpack.c.b16 %v125, %v121
  %v182 = vpack.c.b16 %v126, %v122
  %v183 = vpack.c.b16 %v127, %v123
  %v184 = vpack.c.b16 %v128, %v124
  %v185 = vpack.c.b16 %v133, %v129
  %v186 = vpack.c.b16 %v134, %v130
  %v187 = vpack.c.b16 %v135, %v131
  %v188 = vpack.c.b16 %v136, %v132
  %v189 = vpack.c.b16 %v141, %v137
  %v190 = vpack.c.b16 %v142, %v138
  %v191 = vpack.c.b16 %v143, %v139
  %v192 = vpack.c.b16 %v144, %v140
  %v193 = vpack.c.b16 %v149, %v145
  %v194 = vpack.c.b16 %v150, %v146
  %v195 = vpack.c.b16 %v151, %v147
  %v196 = vpack.c.b16 %v152, %v148
  %v197 = vpack.c.b16 %v157, %v153
  %v198 = vpack.c.b16 %v158, %v154
  %v199 = vpack.c.b16 %v159, %v155
  %v200 = vpack.c.b16 %v160, %v156
  %v201 = vpack.c.b16 %v165, %v161
  %v202 = vpack.c.b16 %v166, %v162
  %v203 = vpack.c.b16 %v167, %v163
  %v204 = vpack.c.b16 %v168, %v164
  %v205 = vpack.c.b16 %v173, %v169
  %v206 = vpack.c.b16 %v174, %v170
  %v207 = vpack.c.b16 %v175, %v171
  %v208 = vpack.c.b16 %v176, %v172
  %241 = vmatprep.subr.bf16.mxu0 %v206
  %242 = vmatpush1.bf16.msra.mxu0 %v205
  %243 = vmatprep.subr.bf16.mxu0 %v202
  %244 = vmatpush1.bf16.msra.mxu0 %v201
  %245 = vmatprep.subr.bf16.mxu0 %v198
  %246 = vmatpush1.bf16.msra.mxu0 %v197
  %247 = vmatprep.subr.bf16.mxu0 %v194
  %248 = vmatpush1.bf16.msra.mxu0 %v193
  %249 = vmatprep.subr.bf16.mxu0 %v190
  %250 = vmatpush1.bf16.msra.mxu0 %v189
  %251 = vmatprep.subr.bf16.mxu0 %v186
  %252 = vmatpush1.bf16.msra.mxu0 %v185
  %253 = vmatprep.subr.bf16.mxu0 %v182
  %254 = vmatpush1.bf16.msra.mxu0 %v181
  %255 = vmatprep.subr.bf16.mxu0 %v178
  %256 = vmatpush1.bf16.msra.mxu0 %v177
  %257 = vmatprep.subr.bf16.mxu0 0
  %258 = vmatpush2.bf16.msra.mxu0 0
  %259 = vmatprep.subr.bf16.mxu0 0
  %260 = vmatpush2.bf16.msra.mxu0 0
  %261 = vmatprep.subr.bf16.mxu0 0
  %262 = vmatpush2.bf16.msra.mxu0 0
  %263 = vmatprep.subr.bf16.mxu0 0
  %264 = vmatpush2.bf16.msra.mxu0 0
  %265 = vmatprep.subr.bf16.mxu0 0
  %266 = vmatpush2.bf16.msra.mxu0 0
  %267 = vmatprep.subr.bf16.mxu0 0
  %268 = vmatpush2.bf16.msra.mxu0 0
  %269 = vmatprep.subr.bf16.mxu0 0
  %270 = vmatpush2.bf16.msra.mxu0 0
  %271 = vmatprep.subr.bf16.mxu0 0
  %272 = vmatpush2.bf16.msra.mxu0 0
  %273 = vmatprep.mubr.bf16.mxu0 0
  %274 = vmatmul.mubr.bf16.gmra.mxu0 %v27
  %v275 = vpop.f32.mrf.mxu0
  %v276 = vadd.f32 %v64, %v275
  %v277 = vpop.f32.mrf.mxu0
  %v278 = vadd.f32 %v68, %v277
  %v279 = vpop.f32.mrf.mxu0
  %v280 = vpop.f32.mrf.mxu0
  %281 = vdwg.mxu0
  %282 = vmatprep.subr.bf16.mxu0 %v208
  %283 = vmatpush1.bf16.msra.mxu0 %v207
  %284 = vmatprep.subr.bf16.mxu0 %v204
  %285 = vmatpush1.bf16.msra.mxu0 %v203
  %286 = vmatprep.subr.bf16.mxu0 %v200
  %287 = vmatpush1.bf16.msra.mxu0 %v199
  %288 = vmatprep.subr.bf16.mxu0 %v196
  %289 = vmatpush1.bf16.msra.mxu0 %v195
  %290 = vmatprep.subr.bf16.mxu0 %v192
  %291 = vmatpush1.bf16.msra.mxu0 %v191
  %292 = vmatprep.subr.bf16.mxu0 %v188
  %293 = vmatpush1.bf16.msra.mxu0 %v187
  %294 = vmatprep.subr.bf16.mxu0 %v184
  %295 = vmatpush1.bf16.msra.mxu0 %v183
  %296 = vmatprep.subr.bf16.mxu0 %v180
  %297 = vmatpush1.bf16.msra.mxu0 %v179
  %298 = vmatprep.subr.bf16.mxu0 0
  %299 = vmatpush2.bf16.msra.mxu0 0
  %300 = vmatprep.subr.bf16.mxu0 0
  %301 = vmatpush2.bf16.msra.mxu0 0
  %302 = vmatprep.subr.bf16.mxu0 0
  %303 = vmatpush2.bf16.msra.mxu0 0
  %304 = vmatprep.subr.bf16.mxu0 0
  %305 = vmatpush2.bf16.msra.mxu0 0
  %306 = vmatprep.subr.bf16.mxu0 0
  %307 = vmatpush2.bf16.msra.mxu0 0
  %308 = vmatprep.subr.bf16.mxu0 0
  %309 = vmatpush2.bf16.msra.mxu0 0
  %310 = vmatprep.subr.bf16.mxu0 0
  %311 = vmatpush2.bf16.msra.mxu0 0
  %312 = vmatprep.subr.bf16.mxu0 0
  %313 = vmatpush2.bf16.msra.mxu0 0
  %314 = vmatprep.mubr.bf16.mxu0 0
  %315 = vmatmul.mubr.bf16.gmra.mxu0 %v27
  %v316 = vpop.f32.mrf.mxu0
  %v317 = vadd.f32 %v72, %v316
  %v318 = vpop.f32.mrf.mxu0
  %v319 = vadd.f32 %v76, %v318
  %v320 = vpop.f32.mrf.mxu0
  %v321 = vpop.f32.mrf.mxu0
  %322 = vdwg.mxu0
  %v323 = vpack.c.bf16 %v25, %v25
  %v324 = vld [vmem:[%s2] sm:$0xff]
  %v325 = vld [vmem:[%s2 + $0x8] sm:$0xff]
  %v326 = vld [vmem:[%s2 + $0x10] sm:$0xff]
  %v327 = vld [vmem:[%s2 + $0x18] sm:$0xff]
  %v328 = vld [vmem:[%s2 + $0x20] sm:$0xff]
  %v329 = vld [vmem:[%s2 + $0x28] sm:$0xff]
  %v330 = vld [vmem:[%s2 + $0x30] sm:$0xff]
  %v331 = vld [vmem:[%s2 + $0x38] sm:$0xff]
  %v332 = vld [vmem:[%s2 + $0x40] sm:$0xff]
  %v333 = vld [vmem:[%s2 + $0x48] sm:$0xff]
  %v334 = vld [vmem:[%s2 + $0x50] sm:$0xff]
  %v335 = vld [vmem:[%s2 + $0x58] sm:$0xff]
  %v336 = vld [vmem:[%s2 + $0x60] sm:$0xff]
  %v337 = vld [vmem:[%s2 + $0x68] sm:$0xff]
  %v338 = vld [vmem:[%s2 + $0x70] sm:$0xff]
  %v339 = vld [vmem:[%s2 + $0x78] sm:$0xff]
  %v340 = vld [vmem:[%s2 + $0x80] sm:$0xff]
  %v341 = vld [vmem:[%s2 + $0x88] sm:$0xff]
  %v342 = vld [vmem:[%s2 + $0x90] sm:$0xff]
  %v343 = vld [vmem:[%s2 + $0x98] sm:$0xff]
  %v344 = vld [vmem:[%s2 + $0xa0] sm:$0xff]
  %v345 = vld [vmem:[%s2 + $0xa8] sm:$0xff]
  %v346 = vld [vmem:[%s2 + $0xb0] sm:$0xff]
  %v347 = vld [vmem:[%s2 + $0xb8] sm:$0xff]
  %v348 = vld [vmem:[%s2 + $0xc0] sm:$0xff]
  %v349 = vld [vmem:[%s2 + $0xc8] sm:$0xff]
  %v350 = vld [vmem:[%s2 + $0xd0] sm:$0xff]
  %v351 = vld [vmem:[%s2 + $0xd8] sm:$0xff]
  %v352 = vld [vmem:[%s2 + $0xe0] sm:$0xff]
  %v353 = vld [vmem:[%s2 + $0xe8] sm:$0xff]
  %v354 = vld [vmem:[%s2 + $0xf0] sm:$0xff]
  %v355 = vld [vmem:[%s2 + $0xf8] sm:$0xff]
  %v388 = vunpack.c.l.b16 %v324
  %v389 = vunpack.c.h.b16 %v324
  %v390 = vunpack.c.l.b16 %v325
  %v391 = vunpack.c.h.b16 %v325
  %v392 = vunpack.c.l.b16 %v326
  %v393 = vunpack.c.h.b16 %v326
  %v394 = vunpack.c.l.b16 %v327
  %v395 = vunpack.c.h.b16 %v327
  %v396 = vunpack.c.l.b16 %v328
  %v397 = vunpack.c.h.b16 %v328
  %v398 = vunpack.c.l.b16 %v329
  %v399 = vunpack.c.h.b16 %v329
  %v400 = vunpack.c.l.b16 %v330
  %v401 = vunpack.c.h.b16 %v330
  %v402 = vunpack.c.l.b16 %v331
  %v403 = vunpack.c.h.b16 %v331
  %v404 = vunpack.c.l.b16 %v332
  %v405 = vunpack.c.h.b16 %v332
  %v406 = vunpack.c.l.b16 %v333
  %v407 = vunpack.c.h.b16 %v333
  %v408 = vunpack.c.l.b16 %v334
  %v409 = vunpack.c.h.b16 %v334
  %v410 = vunpack.c.l.b16 %v335
  %v411 = vunpack.c.h.b16 %v335
  %v412 = vunpack.c.l.b16 %v336
  %v413 = vunpack.c.h.b16 %v336
  %v414 = vunpack.c.l.b16 %v337
  %v415 = vunpack.c.h.b16 %v337
  %v416 = vunpack.c.l.b16 %v338
  %v417 = vunpack.c.h.b16 %v338
  %v418 = vunpack.c.l.b16 %v339
  %v419 = vunpack.c.h.b16 %v339
  %v420 = vunpack.c.l.b16 %v340
  %v421 = vunpack.c.h.b16 %v340
  %v422 = vunpack.c.l.b16 %v341
  %v423 = vunpack.c.h.b16 %v341
  %v424 = vunpack.c.l.b16 %v342
  %v425 = vunpack.c.h.b16 %v342
  %v426 = vunpack.c.l.b16 %v343
  %v427 = vunpack.c.h.b16 %v343
  %v428 = vunpack.c.l.b16 %v344
  %v429 = vunpack.c.h.b16 %v344
  %v430 = vunpack.c.l.b16 %v345
  %v431 = vunpack.c.h.b16 %v345
  %v432 = vunpack.c.l.b16 %v346
  %v433 = vunpack.c.h.b16 %v346
  %v434 = vunpack.c.l.b16 %v347
  %v435 = vunpack.c.h.b16 %v347
  %v436 = vunpack.c.l.b16 %v348
  %v437 = vunpack.c.h.b16 %v348
  %v438 = vunpack.c.l.b16 %v349
  %v439 = vunpack.c.h.b16 %v349
  %v440 = vunpack.c.l.b16 %v350
  %v441 = vunpack.c.h.b16 %v350
  %v442 = vunpack.c.l.b16 %v351
  %v443 = vunpack.c.h.b16 %v351
  %v444 = vunpack.c.l.b16 %v352
  %v445 = vunpack.c.h.b16 %v352
  %v446 = vunpack.c.l.b16 %v353
  %v447 = vunpack.c.h.b16 %v353
  %v448 = vunpack.c.l.b16 %v354
  %v449 = vunpack.c.h.b16 %v354
  %v450 = vunpack.c.l.b16 %v355
  %v451 = vunpack.c.h.b16 %v355
  %v452 = vpack.c.b16 %v392, %v388
  %v453 = vpack.c.b16 %v393, %v389
  %v454 = vpack.c.b16 %v394, %v390
  %v455 = vpack.c.b16 %v395, %v391
  %v456 = vpack.c.b16 %v400, %v396
  %v457 = vpack.c.b16 %v401, %v397
  %v458 = vpack.c.b16 %v402, %v398
  %v459 = vpack.c.b16 %v403, %v399
  %v460 = vpack.c.b16 %v408, %v404
  %v461 = vpack.c.b16 %v409, %v405
  %v462 = vpack.c.b16 %v410, %v406
  %v463 = vpack.c.b16 %v411, %v407
  %v464 = vpack.c.b16 %v416, %v412
  %v465 = vpack.c.b16 %v417, %v413
  %v466 = vpack.c.b16 %v418, %v414
  %v467 = vpack.c.b16 %v419, %v415
  %v468 = vpack.c.b16 %v424, %v420
  %v469 = vpack.c.b16 %v425, %v421
  %v470 = vpack.c.b16 %v426, %v422
  %v471 = vpack.c.b16 %v427, %v423
  %v472 = vpack.c.b16 %v432, %v428
  %v473 = vpack.c.b16 %v433, %v429
  %v474 = vpack.c.b16 %v434, %v430
  %v475 = vpack.c.b16 %v435, %v431
  %v476 = vpack.c.b16 %v440, %v436
  %v477 = vpack.c.b16 %v441, %v437
  %v478 = vpack.c.b16 %v442, %v438
  %v479 = vpack.c.b16 %v443, %v439
  %v480 = vpack.c.b16 %v448, %v444
  %v481 = vpack.c.b16 %v449, %v445
  %v482 = vpack.c.b16 %v450, %v446
  %v483 = vpack.c.b16 %v451, %v447
  %516 = vmatprep.subr.bf16.mxu0 %v481
  %517 = vmatpush1.bf16.msra.mxu0 %v480
  %518 = vmatprep.subr.bf16.mxu0 %v477
  %519 = vmatpush1.bf16.msra.mxu0 %v476
  %520 = vmatprep.subr.bf16.mxu0 %v473
  %521 = vmatpush1.bf16.msra.mxu0 %v472
  %522 = vmatprep.subr.bf16.mxu0 %v469
  %523 = vmatpush1.bf16.msra.mxu0 %v468
  %524 = vmatprep.subr.bf16.mxu0 %v465
  %525 = vmatpush1.bf16.msra.mxu0 %v464
  %526 = vmatprep.subr.bf16.mxu0 %v461
  %527 = vmatpush1.bf16.msra.mxu0 %v460
  %528 = vmatprep.subr.bf16.mxu0 %v457
  %529 = vmatpush1.bf16.msra.mxu0 %v456
  %530 = vmatprep.subr.bf16.mxu0 %v453
  %531 = vmatpush1.bf16.msra.mxu0 %v452
  %532 = vmatprep.subr.bf16.mxu0 0
  %533 = vmatpush2.bf16.msra.mxu0 0
  %534 = vmatprep.subr.bf16.mxu0 0
  %535 = vmatpush2.bf16.msra.mxu0 0
  %536 = vmatprep.subr.bf16.mxu0 0
  %537 = vmatpush2.bf16.msra.mxu0 0
  %538 = vmatprep.subr.bf16.mxu0 0
  %539 = vmatpush2.bf16.msra.mxu0 0
  %540 = vmatprep.subr.bf16.mxu0 0
  %541 = vmatpush2.bf16.msra.mxu0 0
  %542 = vmatprep.subr.bf16.mxu0 0
  %543 = vmatpush2.bf16.msra.mxu0 0
  %544 = vmatprep.subr.bf16.mxu0 0
  %545 = vmatpush2.bf16.msra.mxu0 0
  %546 = vmatprep.subr.bf16.mxu0 0
  %547 = vmatpush2.bf16.msra.mxu0 0
  %548 = vmatprep.mubr.bf16.mxu0 0
  %549 = vmatmul.mubr.bf16.gmra.mxu0 %v323
  %v550 = vpop.f32.mrf.mxu0
  %v551 = vadd.f32 0.0, %v550
  %v552 = vpop.f32.mrf.mxu0
  %v553 = vadd.f32 0.0, %v552
  %v554 = vpop.f32.mrf.mxu0
  %v555 = vpop.f32.mrf.mxu0
  %556 = vdwg.mxu0
  %557 = vmatprep.subr.bf16.mxu0 %v483
  %558 = vmatpush1.bf16.msra.mxu0 %v482
  %559 = vmatprep.subr.bf16.mxu0 %v479
  %560 = vmatpush1.bf16.msra.mxu0 %v478
  %561 = vmatprep.subr.bf16.mxu0 %v475
  %562 = vmatpush1.bf16.msra.mxu0 %v474
  %563 = vmatprep.subr.bf16.mxu0 %v471
  %564 = vmatpush1.bf16.msra.mxu0 %v470
  %565 = vmatprep.subr.bf16.mxu0 %v467
  %566 = vmatpush1.bf16.msra.mxu0 %v466
  %567 = vmatprep.subr.bf16.mxu0 %v463
  %568 = vmatpush1.bf16.msra.mxu0 %v462
  %569 = vmatprep.subr.bf16.mxu0 %v459
  %570 = vmatpush1.bf16.msra.mxu0 %v458
  %571 = vmatprep.subr.bf16.mxu0 %v455
  %572 = vmatpush1.bf16.msra.mxu0 %v454
  %573 = vmatprep.subr.bf16.mxu0 0
  %574 = vmatpush2.bf16.msra.mxu0 0
  %575 = vmatprep.subr.bf16.mxu0 0
  %576 = vmatpush2.bf16.msra.mxu0 0
  %577 = vmatprep.subr.bf16.mxu0 0
  %578 = vmatpush2.bf16.msra.mxu0 0
  %579 = vmatprep.subr.bf16.mxu0 0
  %580 = vmatpush2.bf16.msra.mxu0 0
  %581 = vmatprep.subr.bf16.mxu0 0
  %582 = vmatpush2.bf16.msra.mxu0 0
  %583 = vmatprep.subr.bf16.mxu0 0
  %584 = vmatpush2.bf16.msra.mxu0 0
  %585 = vmatprep.subr.bf16.mxu0 0
  %586 = vmatpush2.bf16.msra.mxu0 0
  %587 = vmatprep.subr.bf16.mxu0 0
  %588 = vmatpush2.bf16.msra.mxu0 0
  %589 = vmatprep.mubr.bf16.mxu0 0
  %590 = vmatmul.mubr.bf16.gmra.mxu0 %v323
  %v591 = vpop.f32.mrf.mxu0
  %v592 = vadd.f32 0.0, %v591
  %v593 = vpop.f32.mrf.mxu0
  %v594 = vadd.f32 0.0, %v593
  %v595 = vpop.f32.mrf.mxu0
  %v596 = vpop.f32.mrf.mxu0
  %597 = vdwg.mxu0
  %v598 = vadd.f32 %v276, %v551
  %v599 = vadd.f32 %v278, %v553
  %v600 = vadd.f32 %v317, %v592
  %v601 = vadd.f32 %v319, %v594
  %v602 = vxor.u32 %v598, 2147483648
  %v603 = vmul.f32 %v602, 1.442695
  %v604 = vpow.pop %v603
  %v605 = vadd.f32 %v604, 1.0
  %v606 = vrcp.pop %v605
  %v607 = vmul.f32 1.0, %v606
  %v608 = vtanh.pop %v600
  %v609 = vmul.f32 %v607, %v608
  %v610 = vxor.u32 %v599, 2147483648
  %v611 = vmul.f32 %v610, 1.442695
  %v612 = vpow.pop %v611
  %v613 = vadd.f32 %v612, 1.0
  %v614 = vrcp.pop %v613
  %v615 = vmul.f32 1.0, %v614
  %v616 = vmul.f32 %v615, %v26
  %v617 = vadd.f32 %v616, %v609
  %v618 = vxor.u32 %v601, 2147483648
  %v619 = vmul.f32 %v618, 1.442695
  %v620 = vpow.pop %v619
  %v621 = vadd.f32 %v620, 1.0
  %v622 = vrcp.pop %v621
  %v623 = vmul.f32 1.0, %v622
  %v624 = vtanh.pop %v617
  %v625 = vmul.f32 %v623, %v624
  %s626 = scalar_lea.vmem %s0, 4
  %v627 = vld [vmem:[%s626] sm:$0xf]
  %628 = vmatprep.subr.bf16.mxu0 %v206
  %629 = vmatpush1.bf16.msra.mxu0 %v205
  %630 = vmatprep.subr.bf16.mxu0 %v202
  %631 = vmatpush1.bf16.msra.mxu0 %v201
  %632 = vmatprep.subr.bf16.mxu0 %v198
  %633 = vmatpush1.bf16.msra.mxu0 %v197
  %634 = vmatprep.subr.bf16.mxu0 %v194
  %635 = vmatpush1.bf16.msra.mxu0 %v193
  %636 = vmatprep.subr.bf16.mxu0 %v190
  %637 = vmatpush1.bf16.msra.mxu0 %v189
  %638 = vmatprep.subr.bf16.mxu0 %v186
  %639 = vmatpush1.bf16.msra.mxu0 %v185
  %640 = vmatprep.subr.bf16.mxu0 %v182
  %641 = vmatpush1.bf16.msra.mxu0 %v181
  %642 = vmatprep.subr.bf16.mxu0 %v178
  %643 = vmatpush1.bf16.msra.mxu0 %v177
  %644 = vmatprep.subr.bf16.mxu0 0
  %645 = vmatpush2.bf16.msra.mxu0 0
  %646 = vmatprep.subr.bf16.mxu0 0
  %647 = vmatpush2.bf16.msra.mxu0 0
  %648 = vmatprep.subr.bf16.mxu0 0
  %649 = vmatpush2.bf16.msra.mxu0 0
  %650 = vmatprep.subr.bf16.mxu0 0
  %651 = vmatpush2.bf16.msra.mxu0 0
  %652 = vmatprep.subr.bf16.mxu0 0
  %653 = vmatpush2.bf16.msra.mxu0 0
  %654 = vmatprep.subr.bf16.mxu0 0
  %655 = vmatpush2.bf16.msra.mxu0 0
  %656 = vmatprep.subr.bf16.mxu0 0
  %657 = vmatpush2.bf16.msra.mxu0 0
  %658 = vmatprep.subr.bf16.mxu0 0
  %659 = vmatpush2.bf16.msra.mxu0 0
  %660 = vmatprep.mubr.bf16.mxu0 0
  %661 = vmatmul.mubr.bf16.gmra.mxu0 %v627
  %v662 = vpop.f32.mrf.mxu0
  %v663 = vadd.f32 %v64, %v662
  %v664 = vpop.f32.mrf.mxu0
  %v665 = vadd.f32 %v68, %v664
  %v666 = vpop.f32.mrf.mxu0
  %v667 = vpop.f32.mrf.mxu0
  %668 = vdwg.mxu0
  %669 = vmatprep.subr.bf16.mxu0 %v208
  %670 = vmatpush1.bf16.msra.mxu0 %v207
  %671 = vmatprep.subr.bf16.mxu0 %v204
  %672 = vmatpush1.bf16.msra.mxu0 %v203
  %673 = vmatprep.subr.bf16.mxu0 %v200
  %674 = vmatpush1.bf16.msra.mxu0 %v199
  %675 = vmatprep.subr.bf16.mxu0 %v196
  %676 = vmatpush1.bf16.msra.mxu0 %v195
  %677 = vmatprep.subr.bf16.mxu0 %v192
  %678 = vmatpush1.bf16.msra.mxu0 %v191
  %679 = vmatprep.subr.bf16.mxu0 %v188
  %680 = vmatpush1.bf16.msra.mxu0 %v187
  %681 = vmatprep.subr.bf16.mxu0 %v184
  %682 = vmatpush1.bf16.msra.mxu0 %v183
  %683 = vmatprep.subr.bf16.mxu0 %v180
  %684 = vmatpush1.bf16.msra.mxu0 %v179
  %685 = vmatprep.subr.bf16.mxu0 0
  %686 = vmatpush2.bf16.msra.mxu0 0
  %687 = vmatprep.subr.bf16.mxu0 0
  %688 = vmatpush2.bf16.msra.mxu0 0
  %689 = vmatprep.subr.bf16.mxu0 0
  %690 = vmatpush2.bf16.msra.mxu0 0
  %691 = vmatprep.subr.bf16.mxu0 0
  %692 = vmatpush2.bf16.msra.mxu0 0
  %693 = vmatprep.subr.bf16.mxu0 0
  %694 = vmatpush2.bf16.msra.mxu0 0
  %695 = vmatprep.subr.bf16.mxu0 0
  %696 = vmatpush2.bf16.msra.mxu0 0
  %697 = vmatprep.subr.bf16.mxu0 0
  %698 = vmatpush2.bf16.msra.mxu0 0
  %699 = vmatprep.subr.bf16.mxu0 0
  %700 = vmatpush2.bf16.msra.mxu0 0
  %701 = vmatprep.mubr.bf16.mxu0 0
  %702 = vmatmul.mubr.bf16.gmra.mxu0 %v627
  %v703 = vpop.f32.mrf.mxu0
  %v704 = vadd.f32 %v72, %v703
  %v705 = vpop.f32.mrf.mxu0
  %v706 = vadd.f32 %v76, %v705
  %v707 = vpop.f32.mrf.mxu0
  %v708 = vpop.f32.mrf.mxu0
  %709 = vdwg.mxu0
  %v710 = vpack.c.bf16 %v625, %v625
  %711 = vmatprep.subr.bf16.mxu0 %v481
  %712 = vmatpush1.bf16.msra.mxu0 %v480
  %713 = vmatprep.subr.bf16.mxu0 %v477
  %714 = vmatpush1.bf16.msra.mxu0 %v476
  %715 = vmatprep.subr.bf16.mxu0 %v473
  %716 = vmatpush1.bf16.msra.mxu0 %v472
  %717 = vmatprep.subr.bf16.mxu0 %v469
  %718 = vmatpush1.bf16.msra.mxu0 %v468
  %719 = vmatprep.subr.bf16.mxu0 %v465
  %720 = vmatpush1.bf16.msra.mxu0 %v464
  %721 = vmatprep.subr.bf16.mxu0 %v461
  %722 = vmatpush1.bf16.msra.mxu0 %v460
  %723 = vmatprep.subr.bf16.mxu0 %v457
  %724 = vmatpush1.bf16.msra.mxu0 %v456
  %725 = vmatprep.subr.bf16.mxu0 %v453
  %726 = vmatpush1.bf16.msra.mxu0 %v452
  %727 = vmatprep.subr.bf16.mxu0 0
  %728 = vmatpush2.bf16.msra.mxu0 0
  %729 = vmatprep.subr.bf16.mxu0 0
  %730 = vmatpush2.bf16.msra.mxu0 0
  %731 = vmatprep.subr.bf16.mxu0 0
  %732 = vmatpush2.bf16.msra.mxu0 0
  %733 = vmatprep.subr.bf16.mxu0 0
  %734 = vmatpush2.bf16.msra.mxu0 0
  %735 = vmatprep.subr.bf16.mxu0 0
  %736 = vmatpush2.bf16.msra.mxu0 0
  %737 = vmatprep.subr.bf16.mxu0 0
  %738 = vmatpush2.bf16.msra.mxu0 0
  %739 = vmatprep.subr.bf16.mxu0 0
  %740 = vmatpush2.bf16.msra.mxu0 0
  %741 = vmatprep.subr.bf16.mxu0 0
  %742 = vmatpush2.bf16.msra.mxu0 0
  %743 = vmatprep.mubr.bf16.mxu0 0
  %744 = vmatmul.mubr.bf16.gmra.mxu0 %v710
  %v745 = vpop.f32.mrf.mxu0
  %v746 = vadd.f32 0.0, %v745
  %v747 = vpop.f32.mrf.mxu0
  %v748 = vadd.f32 0.0, %v747
  %v749 = vpop.f32.mrf.mxu0
  %v750 = vpop.f32.mrf.mxu0
  %751 = vdwg.mxu0
  %752 = vmatprep.subr.bf16.mxu0 %v483
  %753 = vmatpush1.bf16.msra.mxu0 %v482
  %754 = vmatprep.subr.bf16.mxu0 %v479
  %755 = vmatpush1.bf16.msra.mxu0 %v478
  %756 = vmatprep.subr.bf16.mxu0 %v475
  %757 = vmatpush1.bf16.msra.mxu0 %v474
  %758 = vmatprep.subr.bf16.mxu0 %v471
  %759 = vmatpush1.bf16.msra.mxu0 %v470
  %760 = vmatprep.subr.bf16.mxu0 %v467
  %761 = vmatpush1.bf16.msra.mxu0 %v466
  %762 = vmatprep.subr.bf16.mxu0 %v463
  %763 = vmatpush1.bf16.msra.mxu0 %v462
  %764 = vmatprep.subr.bf16.mxu0 %v459
  %765 = vmatpush1.bf16.msra.mxu0 %v458
  %766 = vmatprep.subr.bf16.mxu0 %v455
  %767 = vmatpush1.bf16.msra.mxu0 %v454
  %768 = vmatprep.subr.bf16.mxu0 0
  %769 = vmatpush2.bf16.msra.mxu0 0
  %770 = vmatprep.subr.bf16.mxu0 0
  %771 = vmatpush2.bf16.msra.mxu0 0
  %772 = vmatprep.subr.bf16.mxu0 0
  %773 = vmatpush2.bf16.msra.mxu0 0
  %774 = vmatprep.subr.bf16.mxu0 0
  %775 = vmatpush2.bf16.msra.mxu0 0
  %776 = vmatprep.subr.bf16.mxu0 0
  %777 = vmatpush2.bf16.msra.mxu0 0
  %778 = vmatprep.subr.bf16.mxu0 0
  %779 = vmatpush2.bf16.msra.mxu0 0
  %780 = vmatprep.subr.bf16.mxu0 0
  %781 = vmatpush2.bf16.msra.mxu0 0
  %782 = vmatprep.subr.bf16.mxu0 0
  %783 = vmatpush2.bf16.msra.mxu0 0
  %784 = vmatprep.mubr.bf16.mxu0 0
  %785 = vmatmul.mubr.bf16.gmra.mxu0 %v710
  %v786 = vpop.f32.mrf.mxu0
  %v787 = vadd.f32 0.0, %v786
  %v788 = vpop.f32.mrf.mxu0
  %v789 = vadd.f32 0.0, %v788
  %v790 = vpop.f32.mrf.mxu0
  %v791 = vpop.f32.mrf.mxu0
  %792 = vdwg.mxu0
  %v793 = vadd.f32 %v663, %v746
  %v794 = vadd.f32 %v665, %v748
  %v795 = vadd.f32 %v704, %v787
  %v796 = vadd.f32 %v706, %v789
  %v797 = vxor.u32 %v793, 2147483648
  %v798 = vmul.f32 %v797, 1.442695
  %v799 = vpow.pop %v798
  %v800 = vadd.f32 %v799, 1.0
  %v801 = vrcp.pop %v800
  %v802 = vmul.f32 1.0, %v801
  %v803 = vtanh.pop %v795
  %v804 = vmul.f32 %v802, %v803
  %v805 = vxor.u32 %v794, 2147483648
  %v806 = vmul.f32 %v805, 1.442695
  %v807 = vpow.pop %v806
  %v808 = vadd.f32 %v807, 1.0
  %v809 = vrcp.pop %v808
  %v810 = vmul.f32 1.0, %v809
  %v811 = vmul.f32 %v810, %v617
  %v812 = vadd.f32 %v811, %v804
  %v813 = vxor.u32 %v796, 2147483648
  %v814 = vmul.f32 %v813, 1.442695
  %v815 = vpow.pop %v814
  %v816 = vadd.f32 %v815, 1.0
  %v817 = vrcp.pop %v816
  %v818 = vmul.f32 1.0, %v817
  %v819 = vtanh.pop %v812
  %v820 = vmul.f32 %v818, %v819
  %s821 = scalar_lea.vmem %s0, 8
  %v822 = vld [vmem:[%s821] sm:$0xf]
  %823 = vmatprep.subr.bf16.mxu0 %v206
  %824 = vmatpush1.bf16.msra.mxu0 %v205
  %825 = vmatprep.subr.bf16.mxu0 %v202
  %826 = vmatpush1.bf16.msra.mxu0 %v201
  %827 = vmatprep.subr.bf16.mxu0 %v198
  %828 = vmatpush1.bf16.msra.mxu0 %v197
  %829 = vmatprep.subr.bf16.mxu0 %v194
  %830 = vmatpush1.bf16.msra.mxu0 %v193
  %831 = vmatprep.subr.bf16.mxu0 %v190
  %832 = vmatpush1.bf16.msra.mxu0 %v189
  %833 = vmatprep.subr.bf16.mxu0 %v186
  %834 = vmatpush1.bf16.msra.mxu0 %v185
  %835 = vmatprep.subr.bf16.mxu0 %v182
  %836 = vmatpush1.bf16.msra.mxu0 %v181
  %837 = vmatprep.subr.bf16.mxu0 %v178
  %838 = vmatpush1.bf16.msra.mxu0 %v177
  %839 = vmatprep.subr.bf16.mxu0 0
  %840 = vmatpush2.bf16.msra.mxu0 0
  %841 = vmatprep.subr.bf16.mxu0 0
  %842 = vmatpush2.bf16.msra.mxu0 0
  %843 = vmatprep.subr.bf16.mxu0 0
  %844 = vmatpush2.bf16.msra.mxu0 0
  %845 = vmatprep.subr.bf16.mxu0 0
  %846 = vmatpush2.bf16.msra.mxu0 0
  %847 = vmatprep.subr.bf16.mxu0 0
  %848 = vmatpush2.bf16.msra.mxu0 0
  %849 = vmatprep.subr.bf16.mxu0 0
  %850 = vmatpush2.bf16.msra.mxu0 0
  %851 = vmatprep.subr.bf16.mxu0 0
  %852 = vmatpush2.bf16.msra.mxu0 0
  %853 = vmatprep.subr.bf16.mxu0 0
  %854 = vmatpush2.bf16.msra.mxu0 0
  %855 = vmatprep.mubr.bf16.mxu0 0
  %856 = vmatmul.mubr.bf16.gmra.mxu0 %v822
  %v857 = vpop.f32.mrf.mxu0
  %v858 = vadd.f32 %v64, %v857
  %v859 = vpop.f32.mrf.mxu0
  %v860 = vadd.f32 %v68, %v859
  %v861 = vpop.f32.mrf.mxu0
  %v862 = vpop.f32.mrf.mxu0
  %863 = vdwg.mxu0
  %864 = vmatprep.subr.bf16.mxu0 %v208
  %865 = vmatpush1.bf16.msra.mxu0 %v207
  %866 = vmatprep.subr.bf16.mxu0 %v204
  %867 = vmatpush1.bf16.msra.mxu0 %v203
  %868 = vmatprep.subr.bf16.mxu0 %v200
  %869 = vmatpush1.bf16.msra.mxu0 %v199
  %870 = vmatprep.subr.bf16.mxu0 %v196
  %871 = vmatpush1.bf16.msra.mxu0 %v195
  %872 = vmatprep.subr.bf16.mxu0 %v192
  %873 = vmatpush1.bf16.msra.mxu0 %v191
  %874 = vmatprep.subr.bf16.mxu0 %v188
  %875 = vmatpush1.bf16.msra.mxu0 %v187
  %876 = vmatprep.subr.bf16.mxu0 %v184
  %877 = vmatpush1.bf16.msra.mxu0 %v183
  %878 = vmatprep.subr.bf16.mxu0 %v180
  %879 = vmatpush1.bf16.msra.mxu0 %v179
  %880 = vmatprep.subr.bf16.mxu0 0
  %881 = vmatpush2.bf16.msra.mxu0 0
  %882 = vmatprep.subr.bf16.mxu0 0
  %883 = vmatpush2.bf16.msra.mxu0 0
  %884 = vmatprep.subr.bf16.mxu0 0
  %885 = vmatpush2.bf16.msra.mxu0 0
  %886 = vmatprep.subr.bf16.mxu0 0
  %887 = vmatpush2.bf16.msra.mxu0 0
  %888 = vmatprep.subr.bf16.mxu0 0
  %889 = vmatpush2.bf16.msra.mxu0 0
  %890 = vmatprep.subr.bf16.mxu0 0
  %891 = vmatpush2.bf16.msra.mxu0 0
  %892 = vmatprep.subr.bf16.mxu0 0
  %893 = vmatpush2.bf16.msra.mxu0 0
  %894 = vmatprep.subr.bf16.mxu0 0
  %895 = vmatpush2.bf16.msra.mxu0 0
  %896 = vmatprep.mubr.bf16.mxu0 0
  %897 = vmatmul.mubr.bf16.gmra.mxu0 %v822
  %v898 = vpop.f32.mrf.mxu0
  %v899 = vadd.f32 %v72, %v898
  %v900 = vpop.f32.mrf.mxu0
  %v901 = vadd.f32 %v76, %v900
  %v902 = vpop.f32.mrf.mxu0
  %v903 = vpop.f32.mrf.mxu0
  %904 = vdwg.mxu0
  %v905 = vpack.c.bf16 %v820, %v820
  %906 = vmatprep.subr.bf16.mxu0 %v481
  %907 = vmatpush1.bf16.msra.mxu0 %v480
  %908 = vmatprep.subr.bf16.mxu0 %v477
  %909 = vmatpush1.bf16.msra.mxu0 %v476
  %910 = vmatprep.subr.bf16.mxu0 %v473
  %911 = vmatpush1.bf16.msra.mxu0 %v472
  %912 = vmatprep.subr.bf16.mxu0 %v469
  %913 = vmatpush1.bf16.msra.mxu0 %v468
  %914 = vmatprep.subr.bf16.mxu0 %v465
  %915 = vmatpush1.bf16.msra.mxu0 %v464
  %916 = vmatprep.subr.bf16.mxu0 %v461
  %917 = vmatpush1.bf16.msra.mxu0 %v460
  %918 = vmatprep.subr.bf16.mxu0 %v457
  %919 = vmatpush1.bf16.msra.mxu0 %v456
  %920 = vmatprep.subr.bf16.mxu0 %v453
  %921 = vmatpush1.bf16.msra.mxu0 %v452
  %922 = vmatprep.subr.bf16.mxu0 0
  %923 = vmatpush2.bf16.msra.mxu0 0
  %924 = vmatprep.subr.bf16.mxu0 0
  %925 = vmatpush2.bf16.msra.mxu0 0
  %926 = vmatprep.subr.bf16.mxu0 0
  %927 = vmatpush2.bf16.msra.mxu0 0
  %928 = vmatprep.subr.bf16.mxu0 0
  %929 = vmatpush2.bf16.msra.mxu0 0
  %930 = vmatprep.subr.bf16.mxu0 0
  %931 = vmatpush2.bf16.msra.mxu0 0
  %932 = vmatprep.subr.bf16.mxu0 0
  %933 = vmatpush2.bf16.msra.mxu0 0
  %934 = vmatprep.subr.bf16.mxu0 0
  %935 = vmatpush2.bf16.msra.mxu0 0
  %936 = vmatprep.subr.bf16.mxu0 0
  %937 = vmatpush2.bf16.msra.mxu0 0
  %938 = vmatprep.mubr.bf16.mxu0 0
  %939 = vmatmul.mubr.bf16.gmra.mxu0 %v905
  %v940 = vpop.f32.mrf.mxu0
  %v941 = vadd.f32 0.0, %v940
  %v942 = vpop.f32.mrf.mxu0
  %v943 = vadd.f32 0.0, %v942
  %v944 = vpop.f32.mrf.mxu0
  %v945 = vpop.f32.mrf.mxu0
  %946 = vdwg.mxu0
  %947 = vmatprep.subr.bf16.mxu0 %v483
  %948 = vmatpush1.bf16.msra.mxu0 %v482
  %949 = vmatprep.subr.bf16.mxu0 %v479
  %950 = vmatpush1.bf16.msra.mxu0 %v478
  %951 = vmatprep.subr.bf16.mxu0 %v475
  %952 = vmatpush1.bf16.msra.mxu0 %v474
  %953 = vmatprep.subr.bf16.mxu0 %v471
  %954 = vmatpush1.bf16.msra.mxu0 %v470
  %955 = vmatprep.subr.bf16.mxu0 %v467
  %956 = vmatpush1.bf16.msra.mxu0 %v466
  %957 = vmatprep.subr.bf16.mxu0 %v463
  %958 = vmatpush1.bf16.msra.mxu0 %v462
  %959 = vmatprep.subr.bf16.mxu0 %v459
  %960 = vmatpush1.bf16.msra.mxu0 %v458
  %961 = vmatprep.subr.bf16.mxu0 %v455
  %962 = vmatpush1.bf16.msra.mxu0 %v454
  %963 = vmatprep.subr.bf16.mxu0 0
  %964 = vmatpush2.bf16.msra.mxu0 0
  %965 = vmatprep.subr.bf16.mxu0 0
  %966 = vmatpush2.bf16.msra.mxu0 0
  %967 = vmatprep.subr.bf16.mxu0 0
  %968 = vmatpush2.bf16.msra.mxu0 0
  %969 = vmatprep.subr.bf16.mxu0 0
  %970 = vmatpush2.bf16.msra.mxu0 0
  %971 = vmatprep.subr.bf16.mxu0 0
  %972 = vmatpush2.bf16.msra.mxu0 0
  %973 = vmatprep.subr.bf16.mxu0 0
  %974 = vmatpush2.bf16.msra.mxu0 0
  %975 = vmatprep.subr.bf16.mxu0 0
  %976 = vmatpush2.bf16.msra.mxu0 0
  %977 = vmatprep.subr.bf16.mxu0 0
  %978 = vmatpush2.bf16.msra.mxu0 0
  %979 = vmatprep.mubr.bf16.mxu0 0
  %980 = vmatmul.mubr.bf16.gmra.mxu0 %v905
  %v981 = vpop.f32.mrf.mxu0
  %v982 = vadd.f32 0.0, %v981
  %v983 = vpop.f32.mrf.mxu0
  %v984 = vadd.f32 0.0, %v983
  %v985 = vpop.f32.mrf.mxu0
  %v986 = vpop.f32.mrf.mxu0
  %987 = vdwg.mxu0
  %v988 = vadd.f32 %v858, %v941
  %v989 = vadd.f32 %v860, %v943
  %v990 = vadd.f32 %v899, %v982
  %v991 = vadd.f32 %v901, %v984
  %v992 = vxor.u32 %v988, 2147483648
  %v993 = vmul.f32 %v992, 1.442695
  %v994 = vpow.pop %v993
  %v995 = vadd.f32 %v994, 1.0
  %v996 = vrcp.pop %v995
  %v997 = vmul.f32 1.0, %v996
  %v998 = vtanh.pop %v990
  %v999 = vmul.f32 %v997, %v998
  %v1000 = vxor.u32 %v989, 2147483648
  %v1001 = vmul.f32 %v1000, 1.442695
  %v1002 = vpow.pop %v1001
  %v1003 = vadd.f32 %v1002, 1.0
  %v1004 = vrcp.pop %v1003
  %v1005 = vmul.f32 1.0, %v1004
  %v1006 = vmul.f32 %v1005, %v812
  %v1007 = vadd.f32 %v1006, %v999
  %v1008 = vxor.u32 %v991, 2147483648
  %v1009 = vmul.f32 %v1008, 1.442695
  %v1010 = vpow.pop %v1009
  %v1011 = vadd.f32 %v1010, 1.0
  %v1012 = vrcp.pop %v1011
  %v1013 = vmul.f32 1.0, %v1012
  %v1014 = vtanh.pop %v1007
  %v1015 = vmul.f32 %v1013, %v1014
  %s1016 = scalar_lea.vmem %s0, 12
  %v1017 = vld [vmem:[%s1016] sm:$0xf]
  %1018 = vmatprep.subr.bf16.mxu0 %v206
  %1019 = vmatpush1.bf16.msra.mxu0 %v205
  %1020 = vmatprep.subr.bf16.mxu0 %v202
  %1021 = vmatpush1.bf16.msra.mxu0 %v201
  %1022 = vmatprep.subr.bf16.mxu0 %v198
  %1023 = vmatpush1.bf16.msra.mxu0 %v197
  %1024 = vmatprep.subr.bf16.mxu0 %v194
  %1025 = vmatpush1.bf16.msra.mxu0 %v193
  %1026 = vmatprep.subr.bf16.mxu0 %v190
  %1027 = vmatpush1.bf16.msra.mxu0 %v189
  %1028 = vmatprep.subr.bf16.mxu0 %v186
  %1029 = vmatpush1.bf16.msra.mxu0 %v185
  %1030 = vmatprep.subr.bf16.mxu0 %v182
  %1031 = vmatpush1.bf16.msra.mxu0 %v181
  %1032 = vmatprep.subr.bf16.mxu0 %v178
  %1033 = vmatpush1.bf16.msra.mxu0 %v177
  %1034 = vmatprep.subr.bf16.mxu0 0
  %1035 = vmatpush2.bf16.msra.mxu0 0
  %1036 = vmatprep.subr.bf16.mxu0 0
  %1037 = vmatpush2.bf16.msra.mxu0 0
  %1038 = vmatprep.subr.bf16.mxu0 0
  %1039 = vmatpush2.bf16.msra.mxu0 0
  %1040 = vmatprep.subr.bf16.mxu0 0
  %1041 = vmatpush2.bf16.msra.mxu0 0
  %1042 = vmatprep.subr.bf16.mxu0 0
  %1043 = vmatpush2.bf16.msra.mxu0 0
  %1044 = vmatprep.subr.bf16.mxu0 0
  %1045 = vmatpush2.bf16.msra.mxu0 0
  %1046 = vmatprep.subr.bf16.mxu0 0
  %1047 = vmatpush2.bf16.msra.mxu0 0
  %1048 = vmatprep.subr.bf16.mxu0 0
  %1049 = vmatpush2.bf16.msra.mxu0 0
  %1050 = vmatprep.mubr.bf16.mxu0 0
  %1051 = vmatmul.mubr.bf16.gmra.mxu0 %v1017
  %v1052 = vpop.f32.mrf.mxu0
  %v1053 = vadd.f32 %v64, %v1052
  %v1054 = vpop.f32.mrf.mxu0
  %v1055 = vadd.f32 %v68, %v1054
  %v1056 = vpop.f32.mrf.mxu0
  %v1057 = vpop.f32.mrf.mxu0
  %1058 = vdwg.mxu0
  %1059 = vmatprep.subr.bf16.mxu0 %v208
  %1060 = vmatpush1.bf16.msra.mxu0 %v207
  %1061 = vmatprep.subr.bf16.mxu0 %v204
  %1062 = vmatpush1.bf16.msra.mxu0 %v203
  %1063 = vmatprep.subr.bf16.mxu0 %v200
  %1064 = vmatpush1.bf16.msra.mxu0 %v199
  %1065 = vmatprep.subr.bf16.mxu0 %v196
  %1066 = vmatpush1.bf16.msra.mxu0 %v195
  %1067 = vmatprep.subr.bf16.mxu0 %v192
  %1068 = vmatpush1.bf16.msra.mxu0 %v191
  %1069 = vmatprep.subr.bf16.mxu0 %v188
  %1070 = vmatpush1.bf16.msra.mxu0 %v187
  %1071 = vmatprep.subr.bf16.mxu0 %v184
  %1072 = vmatpush1.bf16.msra.mxu0 %v183
  %1073 = vmatprep.subr.bf16.mxu0 %v180
  %1074 = vmatpush1.bf16.msra.mxu0 %v179
  %1075 = vmatprep.subr.bf16.mxu0 0
  %1076 = vmatpush2.bf16.msra.mxu0 0
  %1077 = vmatprep.subr.bf16.mxu0 0
  %1078 = vmatpush2.bf16.msra.mxu0 0
  %1079 = vmatprep.subr.bf16.mxu0 0
  %1080 = vmatpush2.bf16.msra.mxu0 0
  %1081 = vmatprep.subr.bf16.mxu0 0
  %1082 = vmatpush2.bf16.msra.mxu0 0
  %1083 = vmatprep.subr.bf16.mxu0 0
  %1084 = vmatpush2.bf16.msra.mxu0 0
  %1085 = vmatprep.subr.bf16.mxu0 0
  %1086 = vmatpush2.bf16.msra.mxu0 0
  %1087 = vmatprep.subr.bf16.mxu0 0
  %1088 = vmatpush2.bf16.msra.mxu0 0
  %1089 = vmatprep.subr.bf16.mxu0 0
  %1090 = vmatpush2.bf16.msra.mxu0 0
  %1091 = vmatprep.mubr.bf16.mxu0 0
  %1092 = vmatmul.mubr.bf16.gmra.mxu0 %v1017
  %v1093 = vpop.f32.mrf.mxu0
  %v1094 = vadd.f32 %v72, %v1093
  %v1095 = vpop.f32.mrf.mxu0
  %v1096 = vadd.f32 %v76, %v1095
  %v1097 = vpop.f32.mrf.mxu0
  %v1098 = vpop.f32.mrf.mxu0
  %1099 = vdwg.mxu0
  %v1100 = vpack.c.bf16 %v1015, %v1015
  %1101 = vmatprep.subr.bf16.mxu0 %v481
  %1102 = vmatpush1.bf16.msra.mxu0 %v480
  %1103 = vmatprep.subr.bf16.mxu0 %v477
  %1104 = vmatpush1.bf16.msra.mxu0 %v476
  %1105 = vmatprep.subr.bf16.mxu0 %v473
  %1106 = vmatpush1.bf16.msra.mxu0 %v472
  %1107 = vmatprep.subr.bf16.mxu0 %v469
  %1108 = vmatpush1.bf16.msra.mxu0 %v468
  %1109 = vmatprep.subr.bf16.mxu0 %v465
  %1110 = vmatpush1.bf16.msra.mxu0 %v464
  %1111 = vmatprep.subr.bf16.mxu0 %v461
  %1112 = vmatpush1.bf16.msra.mxu0 %v460
  %1113 = vmatprep.subr.bf16.mxu0 %v457
  %1114 = vmatpush1.bf16.msra.mxu0 %v456
  %1115 = vmatprep.subr.bf16.mxu0 %v453
  %1116 = vmatpush1.bf16.msra.mxu0 %v452
  %1117 = vmatprep.subr.bf16.mxu0 0
  %1118 = vmatpush2.bf16.msra.mxu0 0
  %1119 = vmatprep.subr.bf16.mxu0 0
  %1120 = vmatpush2.bf16.msra.mxu0 0
  %1121 = vmatprep.subr.bf16.mxu0 0
  %1122 = vmatpush2.bf16.msra.mxu0 0
  %1123 = vmatprep.subr.bf16.mxu0 0
  %1124 = vmatpush2.bf16.msra.mxu0 0
  %1125 = vmatprep.subr.bf16.mxu0 0
  %1126 = vmatpush2.bf16.msra.mxu0 0
  %1127 = vmatprep.subr.bf16.mxu0 0
  %1128 = vmatpush2.bf16.msra.mxu0 0
  %1129 = vmatprep.subr.bf16.mxu0 0
  %1130 = vmatpush2.bf16.msra.mxu0 0
  %1131 = vmatprep.subr.bf16.mxu0 0
  %1132 = vmatpush2.bf16.msra.mxu0 0
  %1133 = vmatprep.mubr.bf16.mxu0 0
  %1134 = vmatmul.mubr.bf16.gmra.mxu0 %v1100
  %v1135 = vpop.f32.mrf.mxu0
  %v1136 = vadd.f32 0.0, %v1135
  %v1137 = vpop.f32.mrf.mxu0
  %v1138 = vadd.f32 0.0, %v1137
  %v1139 = vpop.f32.mrf.mxu0
  %v1140 = vpop.f32.mrf.mxu0
  %1141 = vdwg.mxu0
  %1142 = vmatprep.subr.bf16.mxu0 %v483
  %1143 = vmatpush1.bf16.msra.mxu0 %v482
  %1144 = vmatprep.subr.bf16.mxu0 %v479
  %1145 = vmatpush1.bf16.msra.mxu0 %v478
  %1146 = vmatprep.subr.bf16.mxu0 %v475
  %1147 = vmatpush1.bf16.msra.mxu0 %v474
  %1148 = vmatprep.subr.bf16.mxu0 %v471
  %1149 = vmatpush1.bf16.msra.mxu0 %v470
  %1150 = vmatprep.subr.bf16.mxu0 %v467
  %1151 = vmatpush1.bf16.msra.mxu0 %v466
  %1152 = vmatprep.subr.bf16.mxu0 %v463
  %1153 = vmatpush1.bf16.msra.mxu0 %v462
  %1154 = vmatprep.subr.bf16.mxu0 %v459
  %1155 = vmatpush1.bf16.msra.mxu0 %v458
  %1156 = vmatprep.subr.bf16.mxu0 %v455
  %1157 = vmatpush1.bf16.msra.mxu0 %v454
  %1158 = vmatprep.subr.bf16.mxu0 0
  %1159 = vmatpush2.bf16.msra.mxu0 0
  %1160 = vmatprep.subr.bf16.mxu0 0
  %1161 = vmatpush2.bf16.msra.mxu0 0
  %1162 = vmatprep.subr.bf16.mxu0 0
  %1163 = vmatpush2.bf16.msra.mxu0 0
  %1164 = vmatprep.subr.bf16.mxu0 0
  %1165 = vmatpush2.bf16.msra.mxu0 0
  %1166 = vmatprep.subr.bf16.mxu0 0
  %1167 = vmatpush2.bf16.msra.mxu0 0
  %1168 = vmatprep.subr.bf16.mxu0 0
  %1169 = vmatpush2.bf16.msra.mxu0 0
  %1170 = vmatprep.subr.bf16.mxu0 0
  %1171 = vmatpush2.bf16.msra.mxu0 0
  %1172 = vmatprep.subr.bf16.mxu0 0
  %1173 = vmatpush2.bf16.msra.mxu0 0
  %1174 = vmatprep.mubr.bf16.mxu0 0
  %1175 = vmatmul.mubr.bf16.gmra.mxu0 %v1100
  %v1176 = vpop.f32.mrf.mxu0
  %v1177 = vadd.f32 0.0, %v1176
  %v1178 = vpop.f32.mrf.mxu0
  %v1179 = vadd.f32 0.0, %v1178
  %v1180 = vpop.f32.mrf.mxu0
  %v1181 = vpop.f32.mrf.mxu0
  %1182 = vdwg.mxu0
  %v1183 = vadd.f32 %v1053, %v1136
  %v1184 = vadd.f32 %v1055, %v1138
  %v1185 = vadd.f32 %v1094, %v1177
  %v1186 = vadd.f32 %v1096, %v1179
  %v1187 = vxor.u32 %v1183, 2147483648
  %v1188 = vmul.f32 %v1187, 1.442695
  %v1189 = vpow.pop %v1188
  %v1190 = vadd.f32 %v1189, 1.0
  %v1191 = vrcp.pop %v1190
  %v1192 = vmul.f32 1.0, %v1191
  %v1193 = vtanh.pop %v1185
  %v1194 = vmul.f32 %v1192, %v1193
  %v1195 = vxor.u32 %v1184, 2147483648
  %v1196 = vmul.f32 %v1195, 1.442695
  %v1197 = vpow.pop %v1196
  %v1198 = vadd.f32 %v1197, 1.0
  %v1199 = vrcp.pop %v1198
  %v1200 = vmul.f32 1.0, %v1199
  %v1201 = vmul.f32 %v1200, %v1007
  %v1202 = vadd.f32 %v1201, %v1194
  %v1203 = vxor.u32 %v1186, 2147483648
  %v1204 = vmul.f32 %v1203, 1.442695
  %v1205 = vpow.pop %v1204
  %v1206 = vadd.f32 %v1205, 1.0
  %v1207 = vrcp.pop %v1206
  %v1208 = vmul.f32 1.0, %v1207
  %v1209 = vtanh.pop %v1202
  %v1210 = vmul.f32 %v1208, %v1209
  %s1211 = scalar_lea.vmem %s0, 16
  %v1212 = vld [vmem:[%s1211] sm:$0xf]
  %1213 = vmatprep.subr.bf16.mxu0 %v206
  %1214 = vmatpush1.bf16.msra.mxu0 %v205
  %1215 = vmatprep.subr.bf16.mxu0 %v202
  %1216 = vmatpush1.bf16.msra.mxu0 %v201
  %1217 = vmatprep.subr.bf16.mxu0 %v198
  %1218 = vmatpush1.bf16.msra.mxu0 %v197
  %1219 = vmatprep.subr.bf16.mxu0 %v194
  %1220 = vmatpush1.bf16.msra.mxu0 %v193
  %1221 = vmatprep.subr.bf16.mxu0 %v190
  %1222 = vmatpush1.bf16.msra.mxu0 %v189
  %1223 = vmatprep.subr.bf16.mxu0 %v186
  %1224 = vmatpush1.bf16.msra.mxu0 %v185
  %1225 = vmatprep.subr.bf16.mxu0 %v182
  %1226 = vmatpush1.bf16.msra.mxu0 %v181
  %1227 = vmatprep.subr.bf16.mxu0 %v178
  %1228 = vmatpush1.bf16.msra.mxu0 %v177
  %1229 = vmatprep.subr.bf16.mxu0 0
  %1230 = vmatpush2.bf16.msra.mxu0 0
  %1231 = vmatprep.subr.bf16.mxu0 0
  %1232 = vmatpush2.bf16.msra.mxu0 0
  %1233 = vmatprep.subr.bf16.mxu0 0
  %1234 = vmatpush2.bf16.msra.mxu0 0
  %1235 = vmatprep.subr.bf16.mxu0 0
  %1236 = vmatpush2.bf16.msra.mxu0 0
  %1237 = vmatprep.subr.bf16.mxu0 0
  %1238 = vmatpush2.bf16.msra.mxu0 0
  %1239 = vmatprep.subr.bf16.mxu0 0
  %1240 = vmatpush2.bf16.msra.mxu0 0
  %1241 = vmatprep.subr.bf16.mxu0 0
  %1242 = vmatpush2.bf16.msra.mxu0 0
  %1243 = vmatprep.subr.bf16.mxu0 0
  %1244 = vmatpush2.bf16.msra.mxu0 0
  %1245 = vmatprep.mubr.bf16.mxu0 0
  %1246 = vmatmul.mubr.bf16.gmra.mxu0 %v1212
  %v1247 = vpop.f32.mrf.mxu0
  %v1248 = vadd.f32 %v64, %v1247
  %v1249 = vpop.f32.mrf.mxu0
  %v1250 = vadd.f32 %v68, %v1249
  %v1251 = vpop.f32.mrf.mxu0
  %v1252 = vpop.f32.mrf.mxu0
  %1253 = vdwg.mxu0
  %1254 = vmatprep.subr.bf16.mxu0 %v208
  %1255 = vmatpush1.bf16.msra.mxu0 %v207
  %1256 = vmatprep.subr.bf16.mxu0 %v204
  %1257 = vmatpush1.bf16.msra.mxu0 %v203
  %1258 = vmatprep.subr.bf16.mxu0 %v200
  %1259 = vmatpush1.bf16.msra.mxu0 %v199
  %1260 = vmatprep.subr.bf16.mxu0 %v196
  %1261 = vmatpush1.bf16.msra.mxu0 %v195
  %1262 = vmatprep.subr.bf16.mxu0 %v192
  %1263 = vmatpush1.bf16.msra.mxu0 %v191
  %1264 = vmatprep.subr.bf16.mxu0 %v188
  %1265 = vmatpush1.bf16.msra.mxu0 %v187
  %1266 = vmatprep.subr.bf16.mxu0 %v184
  %1267 = vmatpush1.bf16.msra.mxu0 %v183
  %1268 = vmatprep.subr.bf16.mxu0 %v180
  %1269 = vmatpush1.bf16.msra.mxu0 %v179
  %1270 = vmatprep.subr.bf16.mxu0 0
  %1271 = vmatpush2.bf16.msra.mxu0 0
  %1272 = vmatprep.subr.bf16.mxu0 0
  %1273 = vmatpush2.bf16.msra.mxu0 0
  %1274 = vmatprep.subr.bf16.mxu0 0
  %1275 = vmatpush2.bf16.msra.mxu0 0
  %1276 = vmatprep.subr.bf16.mxu0 0
  %1277 = vmatpush2.bf16.msra.mxu0 0
  %1278 = vmatprep.subr.bf16.mxu0 0
  %1279 = vmatpush2.bf16.msra.mxu0 0
  %1280 = vmatprep.subr.bf16.mxu0 0
  %1281 = vmatpush2.bf16.msra.mxu0 0
  %1282 = vmatprep.subr.bf16.mxu0 0
  %1283 = vmatpush2.bf16.msra.mxu0 0
  %1284 = vmatprep.subr.bf16.mxu0 0
  %1285 = vmatpush2.bf16.msra.mxu0 0
  %1286 = vmatprep.mubr.bf16.mxu0 0
  %1287 = vmatmul.mubr.bf16.gmra.mxu0 %v1212
  %v1288 = vpop.f32.mrf.mxu0
  %v1289 = vadd.f32 %v72, %v1288
  %v1290 = vpop.f32.mrf.mxu0
  %v1291 = vadd.f32 %v76, %v1290
  %v1292 = vpop.f32.mrf.mxu0
  %v1293 = vpop.f32.mrf.mxu0
  %1294 = vdwg.mxu0
  %v1295 = vpack.c.bf16 %v1210, %v1210
  %1296 = vmatprep.subr.bf16.mxu0 %v481
  %1297 = vmatpush1.bf16.msra.mxu0 %v480
  %1298 = vmatprep.subr.bf16.mxu0 %v477
  %1299 = vmatpush1.bf16.msra.mxu0 %v476
  %1300 = vmatprep.subr.bf16.mxu0 %v473
  %1301 = vmatpush1.bf16.msra.mxu0 %v472
  %1302 = vmatprep.subr.bf16.mxu0 %v469
  %1303 = vmatpush1.bf16.msra.mxu0 %v468
  %1304 = vmatprep.subr.bf16.mxu0 %v465
  %1305 = vmatpush1.bf16.msra.mxu0 %v464
  %1306 = vmatprep.subr.bf16.mxu0 %v461
  %1307 = vmatpush1.bf16.msra.mxu0 %v460
  %1308 = vmatprep.subr.bf16.mxu0 %v457
  %1309 = vmatpush1.bf16.msra.mxu0 %v456
  %1310 = vmatprep.subr.bf16.mxu0 %v453
  %1311 = vmatpush1.bf16.msra.mxu0 %v452
  %1312 = vmatprep.subr.bf16.mxu0 0
  %1313 = vmatpush2.bf16.msra.mxu0 0
  %1314 = vmatprep.subr.bf16.mxu0 0
  %1315 = vmatpush2.bf16.msra.mxu0 0
  %1316 = vmatprep.subr.bf16.mxu0 0
  %1317 = vmatpush2.bf16.msra.mxu0 0
  %1318 = vmatprep.subr.bf16.mxu0 0
  %1319 = vmatpush2.bf16.msra.mxu0 0
  %1320 = vmatprep.subr.bf16.mxu0 0
  %1321 = vmatpush2.bf16.msra.mxu0 0
  %1322 = vmatprep.subr.bf16.mxu0 0
  %1323 = vmatpush2.bf16.msra.mxu0 0
  %1324 = vmatprep.subr.bf16.mxu0 0
  %1325 = vmatpush2.bf16.msra.mxu0 0
  %1326 = vmatprep.subr.bf16.mxu0 0
  %1327 = vmatpush2.bf16.msra.mxu0 0
  %1328 = vmatprep.mubr.bf16.mxu0 0
  %1329 = vmatmul.mubr.bf16.gmra.mxu0 %v1295
  %v1330 = vpop.f32.mrf.mxu0
  %v1331 = vadd.f32 0.0, %v1330
  %v1332 = vpop.f32.mrf.mxu0
  %v1333 = vadd.f32 0.0, %v1332
  %v1334 = vpop.f32.mrf.mxu0
  %v1335 = vpop.f32.mrf.mxu0
  %1336 = vdwg.mxu0
  %1337 = vmatprep.subr.bf16.mxu0 %v483
  %1338 = vmatpush1.bf16.msra.mxu0 %v482
  %1339 = vmatprep.subr.bf16.mxu0 %v479
  %1340 = vmatpush1.bf16.msra.mxu0 %v478
  %1341 = vmatprep.subr.bf16.mxu0 %v475
  %1342 = vmatpush1.bf16.msra.mxu0 %v474
  %1343 = vmatprep.subr.bf16.mxu0 %v471
  %1344 = vmatpush1.bf16.msra.mxu0 %v470
  %1345 = vmatprep.subr.bf16.mxu0 %v467
  %1346 = vmatpush1.bf16.msra.mxu0 %v466
  %1347 = vmatprep.subr.bf16.mxu0 %v463
  %1348 = vmatpush1.bf16.msra.mxu0 %v462
  %1349 = vmatprep.subr.bf16.mxu0 %v459
  %1350 = vmatpush1.bf16.msra.mxu0 %v458
  %1351 = vmatprep.subr.bf16.mxu0 %v455
  %1352 = vmatpush1.bf16.msra.mxu0 %v454
  %1353 = vmatprep.subr.bf16.mxu0 0
  %1354 = vmatpush2.bf16.msra.mxu0 0
  %1355 = vmatprep.subr.bf16.mxu0 0
  %1356 = vmatpush2.bf16.msra.mxu0 0
  %1357 = vmatprep.subr.bf16.mxu0 0
  %1358 = vmatpush2.bf16.msra.mxu0 0
  %1359 = vmatprep.subr.bf16.mxu0 0
  %1360 = vmatpush2.bf16.msra.mxu0 0
  %1361 = vmatprep.subr.bf16.mxu0 0
  %1362 = vmatpush2.bf16.msra.mxu0 0
  %1363 = vmatprep.subr.bf16.mxu0 0
  %1364 = vmatpush2.bf16.msra.mxu0 0
  %1365 = vmatprep.subr.bf16.mxu0 0
  %1366 = vmatpush2.bf16.msra.mxu0 0
  %1367 = vmatprep.subr.bf16.mxu0 0
  %1368 = vmatpush2.bf16.msra.mxu0 0
  %1369 = vmatprep.mubr.bf16.mxu0 0
  %1370 = vmatmul.mubr.bf16.gmra.mxu0 %v1295
  %v1371 = vpop.f32.mrf.mxu0
  %v1372 = vadd.f32 0.0, %v1371
  %v1373 = vpop.f32.mrf.mxu0
  %v1374 = vadd.f32 0.0, %v1373
  %v1375 = vpop.f32.mrf.mxu0
  %v1376 = vpop.f32.mrf.mxu0
  %1377 = vdwg.mxu0
  %v1378 = vadd.f32 %v1248, %v1331
  %v1379 = vadd.f32 %v1250, %v1333
  %v1380 = vadd.f32 %v1289, %v1372
  %v1381 = vadd.f32 %v1291, %v1374
  %v1382 = vxor.u32 %v1378, 2147483648
  %v1383 = vmul.f32 %v1382, 1.442695
  %v1384 = vpow.pop %v1383
  %v1385 = vadd.f32 %v1384, 1.0
  %v1386 = vrcp.pop %v1385
  %v1387 = vmul.f32 1.0, %v1386
  %v1388 = vtanh.pop %v1380
  %v1389 = vmul.f32 %v1387, %v1388
  %v1390 = vxor.u32 %v1379, 2147483648
  %v1391 = vmul.f32 %v1390, 1.442695
  %v1392 = vpow.pop %v1391
  %v1393 = vadd.f32 %v1392, 1.0
  %v1394 = vrcp.pop %v1393
  %v1395 = vmul.f32 1.0, %v1394
  %v1396 = vmul.f32 %v1395, %v1202
  %v1397 = vadd.f32 %v1396, %v1389
  %v1398 = vxor.u32 %v1381, 2147483648
  %v1399 = vmul.f32 %v1398, 1.442695
  %v1400 = vpow.pop %v1399
  %v1401 = vadd.f32 %v1400, 1.0
  %v1402 = vrcp.pop %v1401
  %v1403 = vmul.f32 1.0, %v1402
  %v1404 = vtanh.pop %v1397
  %v1405 = vmul.f32 %v1403, %v1404
  %s1406 = scalar_lea.vmem %s0, 20
  %v1407 = vld [vmem:[%s1406] sm:$0xf]
  %1408 = vmatprep.subr.bf16.mxu0 %v206
  %1409 = vmatpush1.bf16.msra.mxu0 %v205
  %1410 = vmatprep.subr.bf16.mxu0 %v202
  %1411 = vmatpush1.bf16.msra.mxu0 %v201
  %1412 = vmatprep.subr.bf16.mxu0 %v198
  %1413 = vmatpush1.bf16.msra.mxu0 %v197
  %1414 = vmatprep.subr.bf16.mxu0 %v194
  %1415 = vmatpush1.bf16.msra.mxu0 %v193
  %1416 = vmatprep.subr.bf16.mxu0 %v190
  %1417 = vmatpush1.bf16.msra.mxu0 %v189
  %1418 = vmatprep.subr.bf16.mxu0 %v186
  %1419 = vmatpush1.bf16.msra.mxu0 %v185
  %1420 = vmatprep.subr.bf16.mxu0 %v182
  %1421 = vmatpush1.bf16.msra.mxu0 %v181
  %1422 = vmatprep.subr.bf16.mxu0 %v178
  %1423 = vmatpush1.bf16.msra.mxu0 %v177
  %1424 = vmatprep.subr.bf16.mxu0 0
  %1425 = vmatpush2.bf16.msra.mxu0 0
  %1426 = vmatprep.subr.bf16.mxu0 0
  %1427 = vmatpush2.bf16.msra.mxu0 0
  %1428 = vmatprep.subr.bf16.mxu0 0
  %1429 = vmatpush2.bf16.msra.mxu0 0
  %1430 = vmatprep.subr.bf16.mxu0 0
  %1431 = vmatpush2.bf16.msra.mxu0 0
  %1432 = vmatprep.subr.bf16.mxu0 0
  %1433 = vmatpush2.bf16.msra.mxu0 0
  %1434 = vmatprep.subr.bf16.mxu0 0
  %1435 = vmatpush2.bf16.msra.mxu0 0
  %1436 = vmatprep.subr.bf16.mxu0 0
  %1437 = vmatpush2.bf16.msra.mxu0 0
  %1438 = vmatprep.subr.bf16.mxu0 0
  %1439 = vmatpush2.bf16.msra.mxu0 0
  %1440 = vmatprep.mubr.bf16.mxu0 0
  %1441 = vmatmul.mubr.bf16.gmra.mxu0 %v1407
  %v1442 = vpop.f32.mrf.mxu0
  %v1443 = vadd.f32 %v64, %v1442
  %v1444 = vpop.f32.mrf.mxu0
  %v1445 = vadd.f32 %v68, %v1444
  %v1446 = vpop.f32.mrf.mxu0
  %v1447 = vpop.f32.mrf.mxu0
  %1448 = vdwg.mxu0
  %1449 = vmatprep.subr.bf16.mxu0 %v208
  %1450 = vmatpush1.bf16.msra.mxu0 %v207
  %1451 = vmatprep.subr.bf16.mxu0 %v204
  %1452 = vmatpush1.bf16.msra.mxu0 %v203
  %1453 = vmatprep.subr.bf16.mxu0 %v200
  %1454 = vmatpush1.bf16.msra.mxu0 %v199
  %1455 = vmatprep.subr.bf16.mxu0 %v196
  %1456 = vmatpush1.bf16.msra.mxu0 %v195
  %1457 = vmatprep.subr.bf16.mxu0 %v192
  %1458 = vmatpush1.bf16.msra.mxu0 %v191
  %1459 = vmatprep.subr.bf16.mxu0 %v188
  %1460 = vmatpush1.bf16.msra.mxu0 %v187
  %1461 = vmatprep.subr.bf16.mxu0 %v184
  %1462 = vmatpush1.bf16.msra.mxu0 %v183
  %1463 = vmatprep.subr.bf16.mxu0 %v180
  %1464 = vmatpush1.bf16.msra.mxu0 %v179
  %1465 = vmatprep.subr.bf16.mxu0 0
  %1466 = vmatpush2.bf16.msra.mxu0 0
  %1467 = vmatprep.subr.bf16.mxu0 0
  %1468 = vmatpush2.bf16.msra.mxu0 0
  %1469 = vmatprep.subr.bf16.mxu0 0
  %1470 = vmatpush2.bf16.msra.mxu0 0
  %1471 = vmatprep.subr.bf16.mxu0 0
  %1472 = vmatpush2.bf16.msra.mxu0 0
  %1473 = vmatprep.subr.bf16.mxu0 0
  %1474 = vmatpush2.bf16.msra.mxu0 0
  %1475 = vmatprep.subr.bf16.mxu0 0
  %1476 = vmatpush2.bf16.msra.mxu0 0
  %1477 = vmatprep.subr.bf16.mxu0 0
  %1478 = vmatpush2.bf16.msra.mxu0 0
  %1479 = vmatprep.subr.bf16.mxu0 0
  %1480 = vmatpush2.bf16.msra.mxu0 0
  %1481 = vmatprep.mubr.bf16.mxu0 0
  %1482 = vmatmul.mubr.bf16.gmra.mxu0 %v1407
  %v1483 = vpop.f32.mrf.mxu0
  %v1484 = vadd.f32 %v72, %v1483
  %v1485 = vpop.f32.mrf.mxu0
  %v1486 = vadd.f32 %v76, %v1485
  %v1487 = vpop.f32.mrf.mxu0
  %v1488 = vpop.f32.mrf.mxu0
  %1489 = vdwg.mxu0
  %v1490 = vpack.c.bf16 %v1405, %v1405
  %1491 = vmatprep.subr.bf16.mxu0 %v481
  %1492 = vmatpush1.bf16.msra.mxu0 %v480
  %1493 = vmatprep.subr.bf16.mxu0 %v477
  %1494 = vmatpush1.bf16.msra.mxu0 %v476
  %1495 = vmatprep.subr.bf16.mxu0 %v473
  %1496 = vmatpush1.bf16.msra.mxu0 %v472
  %1497 = vmatprep.subr.bf16.mxu0 %v469
  %1498 = vmatpush1.bf16.msra.mxu0 %v468
  %1499 = vmatprep.subr.bf16.mxu0 %v465
  %1500 = vmatpush1.bf16.msra.mxu0 %v464
  %1501 = vmatprep.subr.bf16.mxu0 %v461
  %1502 = vmatpush1.bf16.msra.mxu0 %v460
  %1503 = vmatprep.subr.bf16.mxu0 %v457
  %1504 = vmatpush1.bf16.msra.mxu0 %v456
  %1505 = vmatprep.subr.bf16.mxu0 %v453
  %1506 = vmatpush1.bf16.msra.mxu0 %v452
  %1507 = vmatprep.subr.bf16.mxu0 0
  %1508 = vmatpush2.bf16.msra.mxu0 0
  %1509 = vmatprep.subr.bf16.mxu0 0
  %1510 = vmatpush2.bf16.msra.mxu0 0
  %1511 = vmatprep.subr.bf16.mxu0 0
  %1512 = vmatpush2.bf16.msra.mxu0 0
  %1513 = vmatprep.subr.bf16.mxu0 0
  %1514 = vmatpush2.bf16.msra.mxu0 0
  %1515 = vmatprep.subr.bf16.mxu0 0
  %1516 = vmatpush2.bf16.msra.mxu0 0
  %1517 = vmatprep.subr.bf16.mxu0 0
  %1518 = vmatpush2.bf16.msra.mxu0 0
  %1519 = vmatprep.subr.bf16.mxu0 0
  %1520 = vmatpush2.bf16.msra.mxu0 0
  %1521 = vmatprep.subr.bf16.mxu0 0
  %1522 = vmatpush2.bf16.msra.mxu0 0
  %1523 = vmatprep.mubr.bf16.mxu0 0
  %1524 = vmatmul.mubr.bf16.gmra.mxu0 %v1490
  %v1525 = vpop.f32.mrf.mxu0
  %v1526 = vadd.f32 0.0, %v1525
  %v1527 = vpop.f32.mrf.mxu0
  %v1528 = vadd.f32 0.0, %v1527
  %v1529 = vpop.f32.mrf.mxu0
  %v1530 = vpop.f32.mrf.mxu0
  %1531 = vdwg.mxu0
  %1532 = vmatprep.subr.bf16.mxu0 %v483
  %1533 = vmatpush1.bf16.msra.mxu0 %v482
  %1534 = vmatprep.subr.bf16.mxu0 %v479
  %1535 = vmatpush1.bf16.msra.mxu0 %v478
  %1536 = vmatprep.subr.bf16.mxu0 %v475
  %1537 = vmatpush1.bf16.msra.mxu0 %v474
  %1538 = vmatprep.subr.bf16.mxu0 %v471
  %1539 = vmatpush1.bf16.msra.mxu0 %v470
  %1540 = vmatprep.subr.bf16.mxu0 %v467
  %1541 = vmatpush1.bf16.msra.mxu0 %v466
  %1542 = vmatprep.subr.bf16.mxu0 %v463
  %1543 = vmatpush1.bf16.msra.mxu0 %v462
  %1544 = vmatprep.subr.bf16.mxu0 %v459
  %1545 = vmatpush1.bf16.msra.mxu0 %v458
  %1546 = vmatprep.subr.bf16.mxu0 %v455
  %1547 = vmatpush1.bf16.msra.mxu0 %v454
  %1548 = vmatprep.subr.bf16.mxu0 0
  %1549 = vmatpush2.bf16.msra.mxu0 0
  %1550 = vmatprep.subr.bf16.mxu0 0
  %1551 = vmatpush2.bf16.msra.mxu0 0
  %1552 = vmatprep.subr.bf16.mxu0 0
  %1553 = vmatpush2.bf16.msra.mxu0 0
  %1554 = vmatprep.subr.bf16.mxu0 0
  %1555 = vmatpush2.bf16.msra.mxu0 0
  %1556 = vmatprep.subr.bf16.mxu0 0
  %1557 = vmatpush2.bf16.msra.mxu0 0
  %1558 = vmatprep.subr.bf16.mxu0 0
  %1559 = vmatpush2.bf16.msra.mxu0 0
  %1560 = vmatprep.subr.bf16.mxu0 0
  %1561 = vmatpush2.bf16.msra.mxu0 0
  %1562 = vmatprep.subr.bf16.mxu0 0
  %1563 = vmatpush2.bf16.msra.mxu0 0
  %1564 = vmatprep.mubr.bf16.mxu0 0
  %1565 = vmatmul.mubr.bf16.gmra.mxu0 %v1490
  %v1566 = vpop.f32.mrf.mxu0
  %v1567 = vadd.f32 0.0, %v1566
  %v1568 = vpop.f32.mrf.mxu0
  %v1569 = vadd.f32 0.0, %v1568
  %v1570 = vpop.f32.mrf.mxu0
  %v1571 = vpop.f32.mrf.mxu0
  %1572 = vdwg.mxu0
  %v1573 = vadd.f32 %v1443, %v1526
  %v1574 = vadd.f32 %v1445, %v1528
  %v1575 = vadd.f32 %v1484, %v1567
  %v1576 = vadd.f32 %v1486, %v1569
  %v1577 = vxor.u32 %v1573, 2147483648
  %v1578 = vmul.f32 %v1577, 1.442695
  %v1579 = vpow.pop %v1578
  %v1580 = vadd.f32 %v1579, 1.0
  %v1581 = vrcp.pop %v1580
  %v1582 = vmul.f32 1.0, %v1581
  %v1583 = vtanh.pop %v1575
  %v1584 = vmul.f32 %v1582, %v1583
  %v1585 = vxor.u32 %v1574, 2147483648
  %v1586 = vmul.f32 %v1585, 1.442695
  %v1587 = vpow.pop %v1586
  %v1588 = vadd.f32 %v1587, 1.0
  %v1589 = vrcp.pop %v1588
  %v1590 = vmul.f32 1.0, %v1589
  %v1591 = vmul.f32 %v1590, %v1397
  %v1592 = vadd.f32 %v1591, %v1584
  %v1593 = vxor.u32 %v1576, 2147483648
  %v1594 = vmul.f32 %v1593, 1.442695
  %v1595 = vpow.pop %v1594
  %v1596 = vadd.f32 %v1595, 1.0
  %v1597 = vrcp.pop %v1596
  %v1598 = vmul.f32 1.0, %v1597
  %v1599 = vtanh.pop %v1592
  %v1600 = vmul.f32 %v1598, %v1599
  %s1601 = scalar_lea.vmem %s0, 24
  %v1602 = vld [vmem:[%s1601] sm:$0xf]
  %1603 = vmatprep.subr.bf16.mxu0 %v206
  %1604 = vmatpush1.bf16.msra.mxu0 %v205
  %1605 = vmatprep.subr.bf16.mxu0 %v202
  %1606 = vmatpush1.bf16.msra.mxu0 %v201
  %1607 = vmatprep.subr.bf16.mxu0 %v198
  %1608 = vmatpush1.bf16.msra.mxu0 %v197
  %1609 = vmatprep.subr.bf16.mxu0 %v194
  %1610 = vmatpush1.bf16.msra.mxu0 %v193
  %1611 = vmatprep.subr.bf16.mxu0 %v190
  %1612 = vmatpush1.bf16.msra.mxu0 %v189
  %1613 = vmatprep.subr.bf16.mxu0 %v186
  %1614 = vmatpush1.bf16.msra.mxu0 %v185
  %1615 = vmatprep.subr.bf16.mxu0 %v182
  %1616 = vmatpush1.bf16.msra.mxu0 %v181
  %1617 = vmatprep.subr.bf16.mxu0 %v178
  %1618 = vmatpush1.bf16.msra.mxu0 %v177
  %1619 = vmatprep.subr.bf16.mxu0 0
  %1620 = vmatpush2.bf16.msra.mxu0 0
  %1621 = vmatprep.subr.bf16.mxu0 0
  %1622 = vmatpush2.bf16.msra.mxu0 0
  %1623 = vmatprep.subr.bf16.mxu0 0
  %1624 = vmatpush2.bf16.msra.mxu0 0
  %1625 = vmatprep.subr.bf16.mxu0 0
  %1626 = vmatpush2.bf16.msra.mxu0 0
  %1627 = vmatprep.subr.bf16.mxu0 0
  %1628 = vmatpush2.bf16.msra.mxu0 0
  %1629 = vmatprep.subr.bf16.mxu0 0
  %1630 = vmatpush2.bf16.msra.mxu0 0
  %1631 = vmatprep.subr.bf16.mxu0 0
  %1632 = vmatpush2.bf16.msra.mxu0 0
  %1633 = vmatprep.subr.bf16.mxu0 0
  %1634 = vmatpush2.bf16.msra.mxu0 0
  %1635 = vmatprep.mubr.bf16.mxu0 0
  %1636 = vmatmul.mubr.bf16.gmra.mxu0 %v1602
  %v1637 = vpop.f32.mrf.mxu0
  %v1638 = vadd.f32 %v64, %v1637
  %v1639 = vpop.f32.mrf.mxu0
  %v1640 = vadd.f32 %v68, %v1639
  %v1641 = vpop.f32.mrf.mxu0
  %v1642 = vpop.f32.mrf.mxu0
  %1643 = vdwg.mxu0
  %1644 = vmatprep.subr.bf16.mxu0 %v208
  %1645 = vmatpush1.bf16.msra.mxu0 %v207
  %1646 = vmatprep.subr.bf16.mxu0 %v204
  %1647 = vmatpush1.bf16.msra.mxu0 %v203
  %1648 = vmatprep.subr.bf16.mxu0 %v200
  %1649 = vmatpush1.bf16.msra.mxu0 %v199
  %1650 = vmatprep.subr.bf16.mxu0 %v196
  %1651 = vmatpush1.bf16.msra.mxu0 %v195
  %1652 = vmatprep.subr.bf16.mxu0 %v192
  %1653 = vmatpush1.bf16.msra.mxu0 %v191
  %1654 = vmatprep.subr.bf16.mxu0 %v188
  %1655 = vmatpush1.bf16.msra.mxu0 %v187
  %1656 = vmatprep.subr.bf16.mxu0 %v184
  %1657 = vmatpush1.bf16.msra.mxu0 %v183
  %1658 = vmatprep.subr.bf16.mxu0 %v180
  %1659 = vmatpush1.bf16.msra.mxu0 %v179
  %1660 = vmatprep.subr.bf16.mxu0 0
  %1661 = vmatpush2.bf16.msra.mxu0 0
  %1662 = vmatprep.subr.bf16.mxu0 0
  %1663 = vmatpush2.bf16.msra.mxu0 0
  %1664 = vmatprep.subr.bf16.mxu0 0
  %1665 = vmatpush2.bf16.msra.mxu0 0
  %1666 = vmatprep.subr.bf16.mxu0 0
  %1667 = vmatpush2.bf16.msra.mxu0 0
  %1668 = vmatprep.subr.bf16.mxu0 0
  %1669 = vmatpush2.bf16.msra.mxu0 0
  %1670 = vmatprep.subr.bf16.mxu0 0
  %1671 = vmatpush2.bf16.msra.mxu0 0
  %1672 = vmatprep.subr.bf16.mxu0 0
  %1673 = vmatpush2.bf16.msra.mxu0 0
  %1674 = vmatprep.subr.bf16.mxu0 0
  %1675 = vmatpush2.bf16.msra.mxu0 0
  %1676 = vmatprep.mubr.bf16.mxu0 0
  %1677 = vmatmul.mubr.bf16.gmra.mxu0 %v1602
  %v1678 = vpop.f32.mrf.mxu0
  %v1679 = vadd.f32 %v72, %v1678
  %v1680 = vpop.f32.mrf.mxu0
  %v1681 = vadd.f32 %v76, %v1680
  %v1682 = vpop.f32.mrf.mxu0
  %v1683 = vpop.f32.mrf.mxu0
  %1684 = vdwg.mxu0
  %v1685 = vpack.c.bf16 %v1600, %v1600
  %1686 = vmatprep.subr.bf16.mxu0 %v481
  %1687 = vmatpush1.bf16.msra.mxu0 %v480
  %1688 = vmatprep.subr.bf16.mxu0 %v477
  %1689 = vmatpush1.bf16.msra.mxu0 %v476
  %1690 = vmatprep.subr.bf16.mxu0 %v473
  %1691 = vmatpush1.bf16.msra.mxu0 %v472
  %1692 = vmatprep.subr.bf16.mxu0 %v469
  %1693 = vmatpush1.bf16.msra.mxu0 %v468
  %1694 = vmatprep.subr.bf16.mxu0 %v465
  %1695 = vmatpush1.bf16.msra.mxu0 %v464
  %1696 = vmatprep.subr.bf16.mxu0 %v461
  %1697 = vmatpush1.bf16.msra.mxu0 %v460
  %1698 = vmatprep.subr.bf16.mxu0 %v457
  %1699 = vmatpush1.bf16.msra.mxu0 %v456
  %1700 = vmatprep.subr.bf16.mxu0 %v453
  %1701 = vmatpush1.bf16.msra.mxu0 %v452
  %1702 = vmatprep.subr.bf16.mxu0 0
  %1703 = vmatpush2.bf16.msra.mxu0 0
  %1704 = vmatprep.subr.bf16.mxu0 0
  %1705 = vmatpush2.bf16.msra.mxu0 0
  %1706 = vmatprep.subr.bf16.mxu0 0
  %1707 = vmatpush2.bf16.msra.mxu0 0
  %1708 = vmatprep.subr.bf16.mxu0 0
  %1709 = vmatpush2.bf16.msra.mxu0 0
  %1710 = vmatprep.subr.bf16.mxu0 0
  %1711 = vmatpush2.bf16.msra.mxu0 0
  %1712 = vmatprep.subr.bf16.mxu0 0
  %1713 = vmatpush2.bf16.msra.mxu0 0
  %1714 = vmatprep.subr.bf16.mxu0 0
  %1715 = vmatpush2.bf16.msra.mxu0 0
  %1716 = vmatprep.subr.bf16.mxu0 0
  %1717 = vmatpush2.bf16.msra.mxu0 0
  %1718 = vmatprep.mubr.bf16.mxu0 0
  %1719 = vmatmul.mubr.bf16.gmra.mxu0 %v1685
  %v1720 = vpop.f32.mrf.mxu0
  %v1721 = vadd.f32 0.0, %v1720
  %v1722 = vpop.f32.mrf.mxu0
  %v1723 = vadd.f32 0.0, %v1722
  %v1724 = vpop.f32.mrf.mxu0
  %v1725 = vpop.f32.mrf.mxu0
  %1726 = vdwg.mxu0
  %1727 = vmatprep.subr.bf16.mxu0 %v483
  %1728 = vmatpush1.bf16.msra.mxu0 %v482
  %1729 = vmatprep.subr.bf16.mxu0 %v479
  %1730 = vmatpush1.bf16.msra.mxu0 %v478
  %1731 = vmatprep.subr.bf16.mxu0 %v475
  %1732 = vmatpush1.bf16.msra.mxu0 %v474
  %1733 = vmatprep.subr.bf16.mxu0 %v471
  %1734 = vmatpush1.bf16.msra.mxu0 %v470
  %1735 = vmatprep.subr.bf16.mxu0 %v467
  %1736 = vmatpush1.bf16.msra.mxu0 %v466
  %1737 = vmatprep.subr.bf16.mxu0 %v463
  %1738 = vmatpush1.bf16.msra.mxu0 %v462
  %1739 = vmatprep.subr.bf16.mxu0 %v459
  %1740 = vmatpush1.bf16.msra.mxu0 %v458
  %1741 = vmatprep.subr.bf16.mxu0 %v455
  %1742 = vmatpush1.bf16.msra.mxu0 %v454
  %1743 = vmatprep.subr.bf16.mxu0 0
  %1744 = vmatpush2.bf16.msra.mxu0 0
  %1745 = vmatprep.subr.bf16.mxu0 0
  %1746 = vmatpush2.bf16.msra.mxu0 0
  %1747 = vmatprep.subr.bf16.mxu0 0
  %1748 = vmatpush2.bf16.msra.mxu0 0
  %1749 = vmatprep.subr.bf16.mxu0 0
  %1750 = vmatpush2.bf16.msra.mxu0 0
  %1751 = vmatprep.subr.bf16.mxu0 0
  %1752 = vmatpush2.bf16.msra.mxu0 0
  %1753 = vmatprep.subr.bf16.mxu0 0
  %1754 = vmatpush2.bf16.msra.mxu0 0
  %1755 = vmatprep.subr.bf16.mxu0 0
  %1756 = vmatpush2.bf16.msra.mxu0 0
  %1757 = vmatprep.subr.bf16.mxu0 0
  %1758 = vmatpush2.bf16.msra.mxu0 0
  %1759 = vmatprep.mubr.bf16.mxu0 0
  %1760 = vmatmul.mubr.bf16.gmra.mxu0 %v1685
  %v1761 = vpop.f32.mrf.mxu0
  %v1762 = vadd.f32 0.0, %v1761
  %v1763 = vpop.f32.mrf.mxu0
  %v1764 = vadd.f32 0.0, %v1763
  %v1765 = vpop.f32.mrf.mxu0
  %v1766 = vpop.f32.mrf.mxu0
  %1767 = vdwg.mxu0
  %v1768 = vadd.f32 %v1638, %v1721
  %v1769 = vadd.f32 %v1640, %v1723
  %v1770 = vadd.f32 %v1679, %v1762
  %v1771 = vadd.f32 %v1681, %v1764
  %v1772 = vxor.u32 %v1768, 2147483648
  %v1773 = vmul.f32 %v1772, 1.442695
  %v1774 = vpow.pop %v1773
  %v1775 = vadd.f32 %v1774, 1.0
  %v1776 = vrcp.pop %v1775
  %v1777 = vmul.f32 1.0, %v1776
  %v1778 = vtanh.pop %v1770
  %v1779 = vmul.f32 %v1777, %v1778
  %v1780 = vxor.u32 %v1769, 2147483648
  %v1781 = vmul.f32 %v1780, 1.442695
  %v1782 = vpow.pop %v1781
  %v1783 = vadd.f32 %v1782, 1.0
  %v1784 = vrcp.pop %v1783
  %v1785 = vmul.f32 1.0, %v1784
  %v1786 = vmul.f32 %v1785, %v1592
  %v1787 = vadd.f32 %v1786, %v1779
  %v1788 = vxor.u32 %v1771, 2147483648
  %v1789 = vmul.f32 %v1788, 1.442695
  %v1790 = vpow.pop %v1789
  %v1791 = vadd.f32 %v1790, 1.0
  %v1792 = vrcp.pop %v1791
  %v1793 = vmul.f32 1.0, %v1792
  %v1794 = vtanh.pop %v1787
  %v1795 = vmul.f32 %v1793, %v1794
  %s1796 = scalar_lea.vmem %s0, 28
  %v1797 = vld [vmem:[%s1796] sm:$0xf]
  %1798 = vmatprep.subr.bf16.mxu0 %v206
  %1799 = vmatpush1.bf16.msra.mxu0 %v205
  %1800 = vmatprep.subr.bf16.mxu0 %v202
  %1801 = vmatpush1.bf16.msra.mxu0 %v201
  %1802 = vmatprep.subr.bf16.mxu0 %v198
  %1803 = vmatpush1.bf16.msra.mxu0 %v197
  %1804 = vmatprep.subr.bf16.mxu0 %v194
  %1805 = vmatpush1.bf16.msra.mxu0 %v193
  %1806 = vmatprep.subr.bf16.mxu0 %v190
  %1807 = vmatpush1.bf16.msra.mxu0 %v189
  %1808 = vmatprep.subr.bf16.mxu0 %v186
  %1809 = vmatpush1.bf16.msra.mxu0 %v185
  %1810 = vmatprep.subr.bf16.mxu0 %v182
  %1811 = vmatpush1.bf16.msra.mxu0 %v181
  %1812 = vmatprep.subr.bf16.mxu0 %v178
  %1813 = vmatpush1.bf16.msra.mxu0 %v177
  %1814 = vmatprep.subr.bf16.mxu0 0
  %1815 = vmatpush2.bf16.msra.mxu0 0
  %1816 = vmatprep.subr.bf16.mxu0 0
  %1817 = vmatpush2.bf16.msra.mxu0 0
  %1818 = vmatprep.subr.bf16.mxu0 0
  %1819 = vmatpush2.bf16.msra.mxu0 0
  %1820 = vmatprep.subr.bf16.mxu0 0
  %1821 = vmatpush2.bf16.msra.mxu0 0
  %1822 = vmatprep.subr.bf16.mxu0 0
  %1823 = vmatpush2.bf16.msra.mxu0 0
  %1824 = vmatprep.subr.bf16.mxu0 0
  %1825 = vmatpush2.bf16.msra.mxu0 0
  %1826 = vmatprep.subr.bf16.mxu0 0
  %1827 = vmatpush2.bf16.msra.mxu0 0
  %1828 = vmatprep.subr.bf16.mxu0 0
  %1829 = vmatpush2.bf16.msra.mxu0 0
  %1830 = vmatprep.mubr.bf16.mxu0 0
  %1831 = vmatmul.mubr.bf16.gmra.mxu0 %v1797
  %v1832 = vpop.f32.mrf.mxu0
  %v1833 = vadd.f32 %v64, %v1832
  %v1834 = vpop.f32.mrf.mxu0
  %v1835 = vadd.f32 %v68, %v1834
  %v1836 = vpop.f32.mrf.mxu0
  %v1837 = vpop.f32.mrf.mxu0
  %1838 = vdwg.mxu0
  %1839 = vmatprep.subr.bf16.mxu0 %v208
  %1840 = vmatpush1.bf16.msra.mxu0 %v207
  %1841 = vmatprep.subr.bf16.mxu0 %v204
  %1842 = vmatpush1.bf16.msra.mxu0 %v203
  %1843 = vmatprep.subr.bf16.mxu0 %v200
  %1844 = vmatpush1.bf16.msra.mxu0 %v199
  %1845 = vmatprep.subr.bf16.mxu0 %v196
  %1846 = vmatpush1.bf16.msra.mxu0 %v195
  %1847 = vmatprep.subr.bf16.mxu0 %v192
  %1848 = vmatpush1.bf16.msra.mxu0 %v191
  %1849 = vmatprep.subr.bf16.mxu0 %v188
  %1850 = vmatpush1.bf16.msra.mxu0 %v187
  %1851 = vmatprep.subr.bf16.mxu0 %v184
  %1852 = vmatpush1.bf16.msra.mxu0 %v183
  %1853 = vmatprep.subr.bf16.mxu0 %v180
  %1854 = vmatpush1.bf16.msra.mxu0 %v179
  %1855 = vmatprep.subr.bf16.mxu0 0
  %1856 = vmatpush2.bf16.msra.mxu0 0
  %1857 = vmatprep.subr.bf16.mxu0 0
  %1858 = vmatpush2.bf16.msra.mxu0 0
  %1859 = vmatprep.subr.bf16.mxu0 0
  %1860 = vmatpush2.bf16.msra.mxu0 0
  %1861 = vmatprep.subr.bf16.mxu0 0
  %1862 = vmatpush2.bf16.msra.mxu0 0
  %1863 = vmatprep.subr.bf16.mxu0 0
  %1864 = vmatpush2.bf16.msra.mxu0 0
  %1865 = vmatprep.subr.bf16.mxu0 0
  %1866 = vmatpush2.bf16.msra.mxu0 0
  %1867 = vmatprep.subr.bf16.mxu0 0
  %1868 = vmatpush2.bf16.msra.mxu0 0
  %1869 = vmatprep.subr.bf16.mxu0 0
  %1870 = vmatpush2.bf16.msra.mxu0 0
  %1871 = vmatprep.mubr.bf16.mxu0 0
  %1872 = vmatmul.mubr.bf16.gmra.mxu0 %v1797
  %v1873 = vpop.f32.mrf.mxu0
  %v1874 = vadd.f32 %v72, %v1873
  %v1875 = vpop.f32.mrf.mxu0
  %v1876 = vadd.f32 %v76, %v1875
  %v1877 = vpop.f32.mrf.mxu0
  %v1878 = vpop.f32.mrf.mxu0
  %1879 = vdwg.mxu0
  %v1880 = vpack.c.bf16 %v1795, %v1795
  %1881 = vmatprep.subr.bf16.mxu0 %v481
  %1882 = vmatpush1.bf16.msra.mxu0 %v480
  %1883 = vmatprep.subr.bf16.mxu0 %v477
  %1884 = vmatpush1.bf16.msra.mxu0 %v476
  %1885 = vmatprep.subr.bf16.mxu0 %v473
  %1886 = vmatpush1.bf16.msra.mxu0 %v472
  %1887 = vmatprep.subr.bf16.mxu0 %v469
  %1888 = vmatpush1.bf16.msra.mxu0 %v468
  %1889 = vmatprep.subr.bf16.mxu0 %v465
  %1890 = vmatpush1.bf16.msra.mxu0 %v464
  %1891 = vmatprep.subr.bf16.mxu0 %v461
  %1892 = vmatpush1.bf16.msra.mxu0 %v460
  %1893 = vmatprep.subr.bf16.mxu0 %v457
  %1894 = vmatpush1.bf16.msra.mxu0 %v456
  %1895 = vmatprep.subr.bf16.mxu0 %v453
  %1896 = vmatpush1.bf16.msra.mxu0 %v452
  %1897 = vmatprep.subr.bf16.mxu0 0
  %1898 = vmatpush2.bf16.msra.mxu0 0
  %1899 = vmatprep.subr.bf16.mxu0 0
  %1900 = vmatpush2.bf16.msra.mxu0 0
  %1901 = vmatprep.subr.bf16.mxu0 0
  %1902 = vmatpush2.bf16.msra.mxu0 0
  %1903 = vmatprep.subr.bf16.mxu0 0
  %1904 = vmatpush2.bf16.msra.mxu0 0
  %1905 = vmatprep.subr.bf16.mxu0 0
  %1906 = vmatpush2.bf16.msra.mxu0 0
  %1907 = vmatprep.subr.bf16.mxu0 0
  %1908 = vmatpush2.bf16.msra.mxu0 0
  %1909 = vmatprep.subr.bf16.mxu0 0
  %1910 = vmatpush2.bf16.msra.mxu0 0
  %1911 = vmatprep.subr.bf16.mxu0 0
  %1912 = vmatpush2.bf16.msra.mxu0 0
  %1913 = vmatprep.mubr.bf16.mxu0 0
  %1914 = vmatmul.mubr.bf16.gmra.mxu0 %v1880
  %v1915 = vpop.f32.mrf.mxu0
  %v1916 = vadd.f32 0.0, %v1915
  %v1917 = vpop.f32.mrf.mxu0
  %v1918 = vadd.f32 0.0, %v1917
  %v1919 = vpop.f32.mrf.mxu0
  %v1920 = vpop.f32.mrf.mxu0
  %1921 = vdwg.mxu0
  %1922 = vmatprep.subr.bf16.mxu0 %v483
  %1923 = vmatpush1.bf16.msra.mxu0 %v482
  %1924 = vmatprep.subr.bf16.mxu0 %v479
  %1925 = vmatpush1.bf16.msra.mxu0 %v478
  %1926 = vmatprep.subr.bf16.mxu0 %v475
  %1927 = vmatpush1.bf16.msra.mxu0 %v474
  %1928 = vmatprep.subr.bf16.mxu0 %v471
  %1929 = vmatpush1.bf16.msra.mxu0 %v470
  %1930 = vmatprep.subr.bf16.mxu0 %v467
  %1931 = vmatpush1.bf16.msra.mxu0 %v466
  %1932 = vmatprep.subr.bf16.mxu0 %v463
  %1933 = vmatpush1.bf16.msra.mxu0 %v462
  %1934 = vmatprep.subr.bf16.mxu0 %v459
  %1935 = vmatpush1.bf16.msra.mxu0 %v458
  %1936 = vmatprep.subr.bf16.mxu0 %v455
  %1937 = vmatpush1.bf16.msra.mxu0 %v454
  %1938 = vmatprep.subr.bf16.mxu0 0
  %1939 = vmatpush2.bf16.msra.mxu0 0
  %1940 = vmatprep.subr.bf16.mxu0 0
  %1941 = vmatpush2.bf16.msra.mxu0 0
  %1942 = vmatprep.subr.bf16.mxu0 0
  %1943 = vmatpush2.bf16.msra.mxu0 0
  %1944 = vmatprep.subr.bf16.mxu0 0
  %1945 = vmatpush2.bf16.msra.mxu0 0
  %1946 = vmatprep.subr.bf16.mxu0 0
  %1947 = vmatpush2.bf16.msra.mxu0 0
  %1948 = vmatprep.subr.bf16.mxu0 0
  %1949 = vmatpush2.bf16.msra.mxu0 0
  %1950 = vmatprep.subr.bf16.mxu0 0
  %1951 = vmatpush2.bf16.msra.mxu0 0
  %1952 = vmatprep.subr.bf16.mxu0 0
  %1953 = vmatpush2.bf16.msra.mxu0 0
  %1954 = vmatprep.mubr.bf16.mxu0 0
  %1955 = vmatmul.mubr.bf16.gmra.mxu0 %v1880
  %v1956 = vpop.f32.mrf.mxu0
  %v1957 = vadd.f32 0.0, %v1956
  %v1958 = vpop.f32.mrf.mxu0
  %v1959 = vadd.f32 0.0, %v1958
  %v1960 = vpop.f32.mrf.mxu0
  %v1961 = vpop.f32.mrf.mxu0
  %1962 = vdwg.mxu0
  %v1963 = vadd.f32 %v1833, %v1916
  %v1964 = vadd.f32 %v1835, %v1918
  %v1965 = vadd.f32 %v1874, %v1957
  %v1966 = vadd.f32 %v1876, %v1959
  %v1967 = vxor.u32 %v1963, 2147483648
  %v1968 = vmul.f32 %v1967, 1.442695
  %v1969 = vpow.pop %v1968
  %v1970 = vadd.f32 %v1969, 1.0
  %v1971 = vrcp.pop %v1970
  %v1972 = vmul.f32 1.0, %v1971
  %v1973 = vtanh.pop %v1965
  %v1974 = vmul.f32 %v1972, %v1973
  %v1975 = vxor.u32 %v1964, 2147483648
  %v1976 = vmul.f32 %v1975, 1.442695
  %v1977 = vpow.pop %v1976
  %v1978 = vadd.f32 %v1977, 1.0
  %v1979 = vrcp.pop %v1978
  %v1980 = vmul.f32 1.0, %v1979
  %v1981 = vmul.f32 %v1980, %v1787
  %v1982 = vadd.f32 %v1981, %v1974
  %v1983 = vxor.u32 %v1966, 2147483648
  %v1984 = vmul.f32 %v1983, 1.442695
  %v1985 = vpow.pop %v1984
  %v1986 = vadd.f32 %v1985, 1.0
  %v1987 = vrcp.pop %v1986
  %v1988 = vmul.f32 1.0, %v1987
  %v1989 = vtanh.pop %v1982
  %v1990 = vmul.f32 %v1988, %v1989
  %1991 = vst [vmem:[#allocation2] sm:$0xff] %v1990
  %1992 = vst [vmem:[#allocation3] sm:$0xff] %v1982
  // Predicated region
  $region22: #{lstm_language_model.2} parent=0 // pred_check
    %p1993 = pneg %p18
  $region23: #{lstm_language_model.2} parent=0 // pred_check_branch
    %1995 = sbr.rel (%p1993) target = $region25
  $region24: #{lstm_language_model.2} parent=0 // pred_region
    %1996 = vst [vmem:[%s4] sm:$0xff] %v1990
  $region25: #{lstm_language_model.2} parent=0 // pred_fallthru
    _
  // Predicated region
  $region26: #{lstm_language_model.2} parent=0 // pred_check
    _
  $region27: #{lstm_language_model.2} parent=0 // pred_check_branch
    %1998 = sbr.rel (0) target = $region29
  $region28: #{lstm_language_model.2} parent=0 // pred_region
    _
  $region29: #{lstm_language_model.2} parent=0 // pred_fallthru
    _
  // Predicated region
  $region30: #{lstm_language_model.2} parent=0 // pred_check
    _
  $region31: #{lstm_language_model.2} parent=0 // pred_check_branch
    %2000 = sbr.rel (0) target = $region33
  $region32: #{lstm_language_model.2} parent=0 // pred_region
    _
  $region33: #{lstm_language_model.2} parent=0 // pred_fallthru
    _

</llo_original>
